<compile_context>
chip_gen: v5e
topology: v5e:2x2
jax: 0.10.0
libtpu: 0.0.40
codegen_flags: <defaults>
</compile_context>

<pallas_src>
import functools
import math

import jax
import jax.numpy as jnp
import numpy as np
from jax.experimental import pallas as pl
from jax.experimental.pallas import tpu as pltpu


# ---------------------------------------------------------------------------
# Host-side shift / crop metadata (cached per (c, q))
# ---------------------------------------------------------------------------
def _crop_bounds(c, q):
    """Reproduces the (start, stop) crop of the PyTorch reference exactly."""
    center = (2 * c - 1) // 2
    if q % 2 == 1:
        start = int(center - c // 2 + math.ceil((c - q) / 2.0))
        stop = int(center + math.ceil(c / 2) - 1 - (c - q) // 2 + 1)
    else:
        start = int(center - c // 2 + math.floor((c - q) / 2.0))
        stop = int(center + math.ceil(c / 2) - 1 - math.ceil((c - q) / 2.0) + 1)
    start = max(start, 0)
    stop = min(stop, 2 * c - 1)
    return start, stop


@functools.lru_cache(maxsize=None)
def _shift_meta(c, q):
    start, stop = _crop_bounds(c, q)
    shifts = tuple(s - (c - 1) for s in range(start, stop))
    ov = np.asarray([c - abs(sh) for sh in shifts], np.float64)  # overlap counts
    inorm = (1.0 / (ov[:, None] * ov[None, :])).astype(np.float32)
    return shifts, inorm


def _pick_channel_block(channels, c, qo):
    """Channels per grid step.  Budget the f32 working set (A/B slabs dominate)
    well under the 32 MiB scoped-VMEM request so it is safe on v7x (64 MiB
    physical per TC) as well as v5e/v6e (128 MiB), and keep >= 2 grid steps so
    v7x's two TensorCores both get work on the 'parallel' axis."""
    per_ch = 4 * (2 * qo * c * c + 4 * c * c + 2 * qo * qo)
    budget = 8 * 1024 * 1024
    cb = max(1, min(channels, budget // max(per_ch, 1)))
    if channels >= 2:
        cb = min(cb, max(1, channels // 2))
    while channels % cb:          # make CB divide the channel count
        cb -= 1
    return cb


# ---------------------------------------------------------------------------
# In-kernel Gram block: one batched MXU contraction per channel block
# ---------------------------------------------------------------------------
def _pad_last(x, left, right):
    """Zero-pad along the last (lane) axis; skips empty pads."""
    parts = []
    if left:
        parts.append(jnp.zeros(x.shape[:-1] + (left,), x.dtype))
    parts.append(x)
    if right:
        parts.append(jnp.zeros(x.shape[:-1] + (right,), x.dtype))
    return jnp.concatenate(parts, axis=-1) if len(parts) > 1 else x


def _gram_block(xflat, inorm, shifts, c):
    """Normalized, cropped autocorrelation for a block of channels.

    xflat: (cb, c*c) f32, row-major flattened (c, c) maps.
    Returns (cb, qo, qo) f32.
    """
    cb, cc = xflat.shape
    smax = max(max(shifts), 0)
    smin = min(min(shifts), 0)

    # Row shifts: shifting the 2-D map by dy rows (zero fill) is a flat shift
    # by dy*c, so A[k, j] = xflat[j + dy_k*c] comes straight from lane slices
    # of a zero-padded copy -- bit-exact, no masking needed.
    xr = _pad_last(xflat, (-smin) * c, smax * c)
    # Column shifts: B[l, j] = xflat[j - dx_l] restricted to the valid columns
    # (a flat shift wraps across rows, so mask on v = j mod c).
    xc = _pad_last(xflat, smax, -smin)
    vcol = jax.lax.broadcasted_iota(jnp.int32, (1, cc), 1) % c

    a_rows, b_rows = [], []
    for sh in shifts:
        s0 = (sh - smin) * c
        a_rows.append(xr[:, s0:s0 + cc])                       # (cb, cc)
        t0 = smax - sh
        col_ok = ((vcol >= sh) & (vcol < c + sh)).astype(jnp.float32)
        b_rows.append(xc[:, t0:t0 + cc] * col_ok)              # (cb, cc)

    a = jnp.stack(a_rows, axis=1)                              # (cb, qo, cc)
    bm = jnp.stack(b_rows, axis=1)                             # (cb, qo, cc)

    # Single batched MXU contraction over K = c*c.  HIGHEST precision keeps
    # near-f32 accuracy (default bf16 inputs can miss the rtol=1e-3 check).
    g = jax.lax.dot_general(
        a, bm,
        dimension_numbers=(((2,), (2,)), ((0,), (0,))),
        precision=jax.lax.Precision.HIGHEST,
        preferred_element_type=jnp.float32)                    # (cb, qo, qo)
    return g * inorm[None, :, :]


def _corr_kernel(x_ref, inorm_ref, g_ref, *, c, shifts):
    """Target construction: write the Gram for one channel block."""
    g_ref[0] = _gram_block(x_ref[0].astype(jnp.float32), inorm_ref[...],
                           shifts, c)


def _corr_mse_kernel(x_ref, gt_ref, inorm_ref, part_ref, *, c, shifts):
    """Forward path: Gram + fused squared-error partial sum (G never hits HBM)."""
    g = _gram_block(x_ref[0].astype(jnp.float32), inorm_ref[...], shifts, c)
    d = g - gt_ref[0].astype(jnp.float32)
    part_ref[...] = jnp.sum(d * d, axis=(0, 1))[None, None, :]   # (1, 1, qo)


# ---------------------------------------------------------------------------
# Wrappers
# ---------------------------------------------------------------------------
def deep_corr_matrix_pallas(feats, q, m):
    """JAX/Pallas equivalent of the PyTorch deep_corr_matrix (batch must be 1)."""
    a, ch, c, d = feats.shape
    assert c == d, "feature maps must be square"
    assert q == m
    assert a == 1, "reference deep_corr_matrix only supports batch == 1"

    shifts, inorm = _shift_meta(c, q)
    qo = len(shifts)
    cb = _pick_channel_block(ch, c, qo)
    nblk = ch // cb
    x3 = feats.reshape(nblk, cb, c * c)      # lane-dense per-channel maps

    kernel = functools.partial(_corr_kernel, c=c, shifts=shifts)
    g = pl.pallas_call(
        kernel,
        out_shape=jax.ShapeDtypeStruct((nblk, cb, qo, qo), jnp.float32),
        grid_spec=pltpu.PrefetchScalarGridSpec(
            num_scalar_prefetch=0,
            grid=(nblk,),
            in_specs=[
                pl.BlockSpec((1, cb, c * c), lambda i: (i, 0, 0)),
                pl.BlockSpec((qo, qo), lambda i: (0, 0)),
            ],
            out_specs=pl.BlockSpec((1, cb, qo, qo), lambda i: (i, 0, 0, 0)),
        ),
        compiler_params=pltpu.CompilerParams(
            dimension_semantics=("parallel",),
            vmem_limit_bytes=32 * 1024 * 1024,
        ),
    )(x3, jnp.asarray(inorm))
    return g.reshape(ch, qo, qo)


def structure_mse_pallas(feats, target, q, m):
    """mean((deep_corr_matrix(feats) - target)**2) with the MSE fused into the
    correlation kernel (one pallas_call, no HBM round-trip of G)."""
    a, ch, c, d = feats.shape
    assert c == d and q == m
    assert a == 1, "reference deep_corr_matrix only supports batch == 1"

    shifts, inorm = _shift_meta(c, q)
    qo = len(shifts)
    assert target.shape == (ch, qo, qo), "target Gram shape mismatch"
    cb = _pick_channel_block(ch, c, qo)
    nblk = ch // cb
    x3 = feats.reshape(nblk, cb, c * c)
    t4 = target.reshape(nblk, cb, qo, qo)

    kernel = functools.partial(_corr_mse_kernel, c=c, shifts=shifts)
    parts = pl.pallas_call(
        kernel,
        out_shape=jax.ShapeDtypeStruct((nblk, 1, qo), jnp.float32),
        grid_spec=pltpu.PrefetchScalarGridSpec(
            num_scalar_prefetch=0,
            grid=(nblk,),
            in_specs=[
                pl.BlockSpec((1, cb, c * c), lambda i: (i, 0, 0)),
                pl.BlockSpec((1, cb, qo, qo), lambda i: (i, 0, 0, 0)),
                pl.BlockSpec((qo, qo), lambda i: (0, 0)),
            ],
            out_specs=pl.BlockSpec((1, 1, qo), lambda i: (i, 0, 0)),
        ),
        compiler_params=pltpu.CompilerParams(
            dimension_semantics=("parallel",),
            vmem_limit_bytes=32 * 1024 * 1024,
        ),
    )(x3, t4, jnp.asarray(inorm))

    # Tiny final reduce + mean in the wrapper.
    return jnp.sum(parts) / jnp.float32(ch * qo * qo)


# ---------------------------------------------------------------------------
# Module
# ---------------------------------------------------------------------------
class StructureLoss:
    """JAX/Pallas equivalent of the PyTorch StructureLoss (forward pass)."""

    def __init__(self, target_feature):
        self.q = int(target_feature.shape[2])
        self.m = int(target_feature.shape[3])
        assert self.q == self.m
        self.target = jax.lax.stop_gradient(
            deep_corr_matrix_pallas(target_feature, self.q, self.m))
        self.loss = None

    def __call__(self, x):
        # Loss is computed with the fused correlation+MSE kernel; the Gram of
        # `x` is never materialized in HBM.  Note: storing self.loss as a side
        # effect captures a tracer under jax.jit (eager use matches PyTorch).
        self.loss = structure_mse_pallas(x, self.target, self.q, self.m)
        # TODO(synk): wrap the loss path in a jax.custom_vjp so it can be
        # backpropagated for style-transfer optimization (pallas_call has no
        # automatic VJP); forward semantics match the PyTorch module.
        return x  # identity passthrough, exactly like the torch module

    forward = __call__


# ---------------------------------------------------------------------------
# Independent NumPy reference (self-test only)
# ---------------------------------------------------------------------------
def _deep_corr_matrix_ref(feats, q, m):
    a, b, c, d = feats.shape
    assert a == 1 and c == d and q == m
    x = np.asarray(feats[0], np.float64)                      # (channels, c, c)
    x_cord = np.concatenate(
        [np.arange(1, c + 1), np.arange(c - 1, 0, -1)]).astype(np.float64)
    norm = x_cord[None, :] * x_cord[:, None]                  # x_grid * y_grid
    r = np.zeros((b, 2 * c - 1, 2 * c - 1))
    for i in range(b):
        xi = x[i]
        for p in range(2 * c - 1):
            dy = p - (c - 1)
            u0, u1 = max(0, -dy), min(c, c - dy)
            for t in range(2 * c - 1):
                dx = t - (c - 1)
                v0, v1 = max(0, -dx), min(c, c - dx)
                r[i, p, t] = np.sum(
                    xi[u0:u1, v0:v1] * xi[u0 + dy:u1 + dy, v0 + dx:v1 + dx])
        r[i] /= norm
    start, stop = _crop_bounds(c, q)
    return r[:, start:stop, start:stop]


if __name__ == "__main__":
    key = jax.random.PRNGKey(0)
    k1, k2 = jax.random.split(key)

    # NCHW; the reference deep_corr_matrix requires batch == 1 (its squeeze()).
    B, C, H, W = 1, 4, 16, 16
    target_feature = jax.random.normal(k1, (B, C, H, W), dtype=jnp.float32)
    x = jax.random.normal(k2, (B, C, H, W), dtype=jnp.float32)

    module = StructureLoss(target_feature)
    out = module(x)

    jax.block_until_ready(out)
    jax.block_until_ready(module.loss)

    # Correctness checks against an independent NumPy reference.
    t_ref = _deep_corr_matrix_ref(np.asarray(target_feature), H, W)
    g_ref = _deep_corr_matrix_ref(np.asarray(x), H, W)
    loss_ref = float(np.mean((g_ref - t_ref) ** 2))

    assert out.shape == x.shape
    assert bool(jnp.all(out == x))
    np.testing.assert_allclose(np.asarray(module.target), t_ref,
                               rtol=1e-3, atol=1e-5)
    np.testing.assert_allclose(float(module.loss), loss_ref,
                               rtol=1e-3, atol=1e-6)

    print("KERNEL_OK")
</pallas_src>

<mosaic_0001>
module attributes {stable_mosaic.version = 11 : i64} {
  func.func @_corr_kernel(%arg0: i32, %arg1: memref<1x2x256xf32, #tpu.memory_space<vmem>>, %arg2: memref<16x16xf32, #tpu.memory_space<vmem>>, %arg3: memref<1x2x16x16xf32, #tpu.memory_space<vmem>>) attributes {dimension_semantics = [#tpu.dimension_semantics<parallel>], iteration_bounds = array<i64: 2>, scalar_prefetch = 0 : i64, scratch_operands = 0 : i64, tpu.core_type = #tpu.core_type<tc>, window_params = [{transform_indices = @transform_0, window_bounds = array<i64: 1, 2, 256>}, {pipeline_mode = #tpu.pipeline_mode<synchronous>, transform_indices = @transform_1, window_bounds = array<i64: 16, 16>}, {transform_indices = @transform_2, window_bounds = array<i64: 1, 2, 16, 16>}]} {
    %c0 = arith.constant 0 : index
    %c0_0 = arith.constant 0 : index
    %c0_1 = arith.constant 0 : index
    %0 = vector.load %arg1[%c0, %c0_0, %c0_1] : memref<1x2x256xf32, #tpu.memory_space<vmem>>, vector<1x2x256xf32>
    %1 = vector.shape_cast %0 : vector<1x2x256xf32> to vector<2x256xf32>
    %c0_2 = arith.constant 0 : index
    %c0_3 = arith.constant 0 : index
    %2 = vector.load %arg2[%c0_2, %c0_3] : memref<16x16xf32, #tpu.memory_space<vmem>>, vector<16x16xf32>
    %cst = arith.constant 0.000000e+00 : f32
    %3 = vector.broadcast %cst : f32 to vector<2x128xf32>
    %cst_4 = arith.constant 0.000000e+00 : f32
    %4 = vector.broadcast %cst_4 : f32 to vector<2x112xf32>
    %5 = tpu.concatenate %3, %1, %4 in 1 : vector<2x128xf32>, vector<2x256xf32>, vector<2x112xf32> -> vector<2x496xf32>
    %cst_5 = arith.constant 0.000000e+00 : f32
    %6 = vector.broadcast %cst_5 : f32 to vector<2x7xf32>
    %cst_6 = arith.constant 0.000000e+00 : f32
    %7 = vector.broadcast %cst_6 : f32 to vector<2x8xf32>
    %8 = tpu.concatenate %6, %1, %7 in 1 : vector<2x7xf32>, vector<2x256xf32>, vector<2x8xf32> -> vector<2x271xf32>
    %9 = tpu.iota {dimensions = array<i32: 1>} : vector<1x256xi32>
    %c16_i32 = arith.constant 16 : i32
    %c0_i32 = arith.constant 0 : i32
    %10 = arith.cmpi eq, %c16_i32, %c0_i32 : i32
    %c1_i32 = arith.constant 1 : i32
    %11 = arith.select %10, %c1_i32, %c16_i32 : i32
    %12 = vector.broadcast %11 : i32 to vector<1x256xi32>
    %13 = arith.remsi %9, %12 : vector<1x256xi32>
    %c0_i32_7 = arith.constant 0 : i32
    %14 = vector.broadcast %c0_i32_7 : i32 to vector<1x256xi32>
    %15 = arith.cmpi ne, %13, %14 : vector<1x256xi32>
    %c0_i32_8 = arith.constant 0 : i32
    %16 = vector.broadcast %c0_i32_8 : i32 to vector<1x256xi32>
    %17 = arith.cmpi slt, %13, %16 : vector<1x256xi32>
    %c0_i32_9 = arith.constant 0 : i32
    %18 = arith.cmpi slt, %11, %c0_i32_9 : i32
    %19 = vector.broadcast %18 : i1 to vector<1x256xi1>
    %20 = vector.broadcast %19 : vector<1x256xi1> to vector<1x256xi1>
    %21 = arith.xori %17, %20 : vector<1x256xi1>
    %22 = arith.andi %21, %15 : vector<1x256xi1>
    %23 = vector.broadcast %11 : i32 to vector<1x256xi32>
    %24 = arith.addi %13, %23 : vector<1x256xi32>
    %25 = arith.select %22, %24, %13 : vector<1x256xi1>, vector<1x256xi32>
    %26 = vector.extract_strided_slice %5 {offsets = [0, 0], sizes = [2, 256], strides = [1, 1]} : vector<2x496xf32> to vector<2x256xf32>
    %c-8_i32 = arith.constant -8 : i32
    %27 = vector.broadcast %c-8_i32 : i32 to vector<1x256xi32>
    %28 = arith.cmpi sge, %25, %27 : vector<1x256xi32>
    %c8_i32 = arith.constant 8 : i32
    %29 = vector.broadcast %c8_i32 : i32 to vector<1x256xi32>
    %30 = arith.cmpi slt, %25, %29 : vector<1x256xi32>
    %31 = arith.andi %28, %30 : vector<1x256xi1>
    %32 = arith.extui %31 : vector<1x256xi1> to vector<1x256xi32>
    %33 = arith.sitofp %32 : vector<1x256xi32> to vector<1x256xf32>
    %34 = vector.extract_strided_slice %8 {offsets = [0, 15], sizes = [2, 256], strides = [1, 1]} : vector<2x271xf32> to vector<2x256xf32>
    %35 = vector.broadcast %33 : vector<1x256xf32> to vector<2x256xf32>
    %36 = arith.mulf %34, %35 : vector<2x256xf32>
    %37 = vector.extract_strided_slice %5 {offsets = [0, 16], sizes = [2, 256], strides = [1, 1]} : vector<2x496xf32> to vector<2x256xf32>
    %c-7_i32 = arith.constant -7 : i32
    %38 = vector.broadcast %c-7_i32 : i32 to vector<1x256xi32>
    %39 = arith.cmpi sge, %25, %38 : vector<1x256xi32>
    %c9_i32 = arith.constant 9 : i32
    %40 = vector.broadcast %c9_i32 : i32 to vector<1x256xi32>
    %41 = arith.cmpi slt, %25, %40 : vector<1x256xi32>
    %42 = arith.andi %39, %41 : vector<1x256xi1>
    %43 = arith.extui %42 : vector<1x256xi1> to vector<1x256xi32>
    %44 = arith.sitofp %43 : vector<1x256xi32> to vector<1x256xf32>
    %45 = vector.extract_strided_slice %8 {offsets = [0, 14], sizes = [2, 256], strides = [1, 1]} : vector<2x271xf32> to vector<2x256xf32>
    %46 = vector.broadcast %44 : vector<1x256xf32> to vector<2x256xf32>
    %47 = arith.mulf %45, %46 : vector<2x256xf32>
    %48 = vector.extract_strided_slice %5 {offsets = [0, 32], sizes = [2, 256], strides = [1, 1]} : vector<2x496xf32> to vector<2x256xf32>
    %c-6_i32 = arith.constant -6 : i32
    %49 = vector.broadcast %c-6_i32 : i32 to vector<1x256xi32>
    %50 = arith.cmpi sge, %25, %49 : vector<1x256xi32>
    %c10_i32 = arith.constant 10 : i32
    %51 = vector.broadcast %c10_i32 : i32 to vector<1x256xi32>
    %52 = arith.cmpi slt, %25, %51 : vector<1x256xi32>
    %53 = arith.andi %50, %52 : vector<1x256xi1>
    %54 = arith.extui %53 : vector<1x256xi1> to vector<1x256xi32>
    %55 = arith.sitofp %54 : vector<1x256xi32> to vector<1x256xf32>
    %56 = vector.extract_strided_slice %8 {offsets = [0, 13], sizes = [2, 256], strides = [1, 1]} : vector<2x271xf32> to vector<2x256xf32>
    %57 = vector.broadcast %55 : vector<1x256xf32> to vector<2x256xf32>
    %58 = arith.mulf %56, %57 : vector<2x256xf32>
    %59 = vector.extract_strided_slice %5 {offsets = [0, 48], sizes = [2, 256], strides = [1, 1]} : vector<2x496xf32> to vector<2x256xf32>
    %c-5_i32 = arith.constant -5 : i32
    %60 = vector.broadcast %c-5_i32 : i32 to vector<1x256xi32>
    %61 = arith.cmpi sge, %25, %60 : vector<1x256xi32>
    %c11_i32 = arith.constant 11 : i32
    %62 = vector.broadcast %c11_i32 : i32 to vector<1x256xi32>
    %63 = arith.cmpi slt, %25, %62 : vector<1x256xi32>
    %64 = arith.andi %61, %63 : vector<1x256xi1>
    %65 = arith.extui %64 : vector<1x256xi1> to vector<1x256xi32>
    %66 = arith.sitofp %65 : vector<1x256xi32> to vector<1x256xf32>
    %67 = vector.extract_strided_slice %8 {offsets = [0, 12], sizes = [2, 256], strides = [1, 1]} : vector<2x271xf32> to vector<2x256xf32>
    %68 = vector.broadcast %66 : vector<1x256xf32> to vector<2x256xf32>
    %69 = arith.mulf %67, %68 : vector<2x256xf32>
    %70 = vector.extract_strided_slice %5 {offsets = [0, 64], sizes = [2, 256], strides = [1, 1]} : vector<2x496xf32> to vector<2x256xf32>
    %c-4_i32 = arith.constant -4 : i32
    %71 = vector.broadcast %c-4_i32 : i32 to vector<1x256xi32>
    %72 = arith.cmpi sge, %25, %71 : vector<1x256xi32>
    %c12_i32 = arith.constant 12 : i32
    %73 = vector.broadcast %c12_i32 : i32 to vector<1x256xi32>
    %74 = arith.cmpi slt, %25, %73 : vector<1x256xi32>
    %75 = arith.andi %72, %74 : vector<1x256xi1>
    %76 = arith.extui %75 : vector<1x256xi1> to vector<1x256xi32>
    %77 = arith.sitofp %76 : vector<1x256xi32> to vector<1x256xf32>
    %78 = vector.extract_strided_slice %8 {offsets = [0, 11], sizes = [2, 256], strides = [1, 1]} : vector<2x271xf32> to vector<2x256xf32>
    %79 = vector.broadcast %77 : vector<1x256xf32> to vector<2x256xf32>
    %80 = arith.mulf %78, %79 : vector<2x256xf32>
    %81 = vector.extract_strided_slice %5 {offsets = [0, 80], sizes = [2, 256], strides = [1, 1]} : vector<2x496xf32> to vector<2x256xf32>
    %c-3_i32 = arith.constant -3 : i32
    %82 = vector.broadcast %c-3_i32 : i32 to vector<1x256xi32>
    %83 = arith.cmpi sge, %25, %82 : vector<1x256xi32>
    %c13_i32 = arith.constant 13 : i32
    %84 = vector.broadcast %c13_i32 : i32 to vector<1x256xi32>
    %85 = arith.cmpi slt, %25, %84 : vector<1x256xi32>
    %86 = arith.andi %83, %85 : vector<1x256xi1>
    %87 = arith.extui %86 : vector<1x256xi1> to vector<1x256xi32>
    %88 = arith.sitofp %87 : vector<1x256xi32> to vector<1x256xf32>
    %89 = vector.extract_strided_slice %8 {offsets = [0, 10], sizes = [2, 256], strides = [1, 1]} : vector<2x271xf32> to vector<2x256xf32>
    %90 = vector.broadcast %88 : vector<1x256xf32> to vector<2x256xf32>
    %91 = arith.mulf %89, %90 : vector<2x256xf32>
    %92 = vector.extract_strided_slice %5 {offsets = [0, 96], sizes = [2, 256], strides = [1, 1]} : vector<2x496xf32> to vector<2x256xf32>
    %c-2_i32 = arith.constant -2 : i32
    %93 = vector.broadcast %c-2_i32 : i32 to vector<1x256xi32>
    %94 = arith.cmpi sge, %25, %93 : vector<1x256xi32>
    %c14_i32 = arith.constant 14 : i32
    %95 = vector.broadcast %c14_i32 : i32 to vector<1x256xi32>
    %96 = arith.cmpi slt, %25, %95 : vector<1x256xi32>
    %97 = arith.andi %94, %96 : vector<1x256xi1>
    %98 = arith.extui %97 : vector<1x256xi1> to vector<1x256xi32>
    %99 = arith.sitofp %98 : vector<1x256xi32> to vector<1x256xf32>
    %100 = vector.extract_strided_slice %8 {offsets = [0, 9], sizes = [2, 256], strides = [1, 1]} : vector<2x271xf32> to vector<2x256xf32>
    %101 = vector.broadcast %99 : vector<1x256xf32> to vector<2x256xf32>
    %102 = arith.mulf %100, %101 : vector<2x256xf32>
    %103 = vector.extract_strided_slice %5 {offsets = [0, 112], sizes = [2, 256], strides = [1, 1]} : vector<2x496xf32> to vector<2x256xf32>
    %c-1_i32 = arith.constant -1 : i32
    %104 = vector.broadcast %c-1_i32 : i32 to vector<1x256xi32>
    %105 = arith.cmpi sge, %25, %104 : vector<1x256xi32>
    %c15_i32 = arith.constant 15 : i32
    %106 = vector.broadcast %c15_i32 : i32 to vector<1x256xi32>
    %107 = arith.cmpi slt, %25, %106 : vector<1x256xi32>
    %108 = arith.andi %105, %107 : vector<1x256xi1>
    %109 = arith.extui %108 : vector<1x256xi1> to vector<1x256xi32>
    %110 = arith.sitofp %109 : vector<1x256xi32> to vector<1x256xf32>
    %111 = vector.extract_strided_slice %8 {offsets = [0, 8], sizes = [2, 256], strides = [1, 1]} : vector<2x271xf32> to vector<2x256xf32>
    %112 = vector.broadcast %110 : vector<1x256xf32> to vector<2x256xf32>
    %113 = arith.mulf %111, %112 : vector<2x256xf32>
    %114 = vector.extract_strided_slice %5 {offsets = [0, 128], sizes = [2, 256], strides = [1, 1]} : vector<2x496xf32> to vector<2x256xf32>
    %c0_i32_10 = arith.constant 0 : i32
    %115 = vector.broadcast %c0_i32_10 : i32 to vector<1x256xi32>
    %116 = arith.cmpi sge, %25, %115 : vector<1x256xi32>
    %c16_i32_11 = arith.constant 16 : i32
    %117 = vector.broadcast %c16_i32_11 : i32 to vector<1x256xi32>
    %118 = arith.cmpi slt, %25, %117 : vector<1x256xi32>
    %119 = arith.andi %116, %118 : vector<1x256xi1>
    %120 = arith.extui %119 : vector<1x256xi1> to vector<1x256xi32>
    %121 = arith.sitofp %120 : vector<1x256xi32> to vector<1x256xf32>
    %122 = vector.extract_strided_slice %8 {offsets = [0, 7], sizes = [2, 256], strides = [1, 1]} : vector<2x271xf32> to vector<2x256xf32>
    %123 = vector.broadcast %121 : vector<1x256xf32> to vector<2x256xf32>
    %124 = arith.mulf %122, %123 : vector<2x256xf32>
    %125 = vector.extract_strided_slice %5 {offsets = [0, 144], sizes = [2, 256], strides = [1, 1]} : vector<2x496xf32> to vector<2x256xf32>
    %c1_i32_12 = arith.constant 1 : i32
    %126 = vector.broadcast %c1_i32_12 : i32 to vector<1x256xi32>
    %127 = arith.cmpi sge, %25, %126 : vector<1x256xi32>
    %c17_i32 = arith.constant 17 : i32
    %128 = vector.broadcast %c17_i32 : i32 to vector<1x256xi32>
    %129 = arith.cmpi slt, %25, %128 : vector<1x256xi32>
    %130 = arith.andi %127, %129 : vector<1x256xi1>
    %131 = arith.extui %130 : vector<1x256xi1> to vector<1x256xi32>
    %132 = arith.sitofp %131 : vector<1x256xi32> to vector<1x256xf32>
    %133 = vector.extract_strided_slice %8 {offsets = [0, 6], sizes = [2, 256], strides = [1, 1]} : vector<2x271xf32> to vector<2x256xf32>
    %134 = vector.broadcast %132 : vector<1x256xf32> to vector<2x256xf32>
    %135 = arith.mulf %133, %134 : vector<2x256xf32>
    %136 = vector.extract_strided_slice %5 {offsets = [0, 160], sizes = [2, 256], strides = [1, 1]} : vector<2x496xf32> to vector<2x256xf32>
    %c2_i32 = arith.constant 2 : i32
    %137 = vector.broadcast %c2_i32 : i32 to vector<1x256xi32>
    %138 = arith.cmpi sge, %25, %137 : vector<1x256xi32>
    %c18_i32 = arith.constant 18 : i32
    %139 = vector.broadcast %c18_i32 : i32 to vector<1x256xi32>
    %140 = arith.cmpi slt, %25, %139 : vector<1x256xi32>
    %141 = arith.andi %138, %140 : vector<1x256xi1>
    %142 = arith.extui %141 : vector<1x256xi1> to vector<1x256xi32>
    %143 = arith.sitofp %142 : vector<1x256xi32> to vector<1x256xf32>
    %144 = vector.extract_strided_slice %8 {offsets = [0, 5], sizes = [2, 256], strides = [1, 1]} : vector<2x271xf32> to vector<2x256xf32>
    %145 = vector.broadcast %143 : vector<1x256xf32> to vector<2x256xf32>
    %146 = arith.mulf %144, %145 : vector<2x256xf32>
    %147 = vector.extract_strided_slice %5 {offsets = [0, 176], sizes = [2, 256], strides = [1, 1]} : vector<2x496xf32> to vector<2x256xf32>
    %c3_i32 = arith.constant 3 : i32
    %148 = vector.broadcast %c3_i32 : i32 to vector<1x256xi32>
    %149 = arith.cmpi sge, %25, %148 : vector<1x256xi32>
    %c19_i32 = arith.constant 19 : i32
    %150 = vector.broadcast %c19_i32 : i32 to vector<1x256xi32>
    %151 = arith.cmpi slt, %25, %150 : vector<1x256xi32>
    %152 = arith.andi %149, %151 : vector<1x256xi1>
    %153 = arith.extui %152 : vector<1x256xi1> to vector<1x256xi32>
    %154 = arith.sitofp %153 : vector<1x256xi32> to vector<1x256xf32>
    %155 = vector.extract_strided_slice %8 {offsets = [0, 4], sizes = [2, 256], strides = [1, 1]} : vector<2x271xf32> to vector<2x256xf32>
    %156 = vector.broadcast %154 : vector<1x256xf32> to vector<2x256xf32>
    %157 = arith.mulf %155, %156 : vector<2x256xf32>
    %158 = vector.extract_strided_slice %5 {offsets = [0, 192], sizes = [2, 256], strides = [1, 1]} : vector<2x496xf32> to vector<2x256xf32>
    %c4_i32 = arith.constant 4 : i32
    %159 = vector.broadcast %c4_i32 : i32 to vector<1x256xi32>
    %160 = arith.cmpi sge, %25, %159 : vector<1x256xi32>
    %c20_i32 = arith.constant 20 : i32
    %161 = vector.broadcast %c20_i32 : i32 to vector<1x256xi32>
    %162 = arith.cmpi slt, %25, %161 : vector<1x256xi32>
    %163 = arith.andi %160, %162 : vector<1x256xi1>
    %164 = arith.extui %163 : vector<1x256xi1> to vector<1x256xi32>
    %165 = arith.sitofp %164 : vector<1x256xi32> to vector<1x256xf32>
    %166 = vector.extract_strided_slice %8 {offsets = [0, 3], sizes = [2, 256], strides = [1, 1]} : vector<2x271xf32> to vector<2x256xf32>
    %167 = vector.broadcast %165 : vector<1x256xf32> to vector<2x256xf32>
    %168 = arith.mulf %166, %167 : vector<2x256xf32>
    %169 = vector.extract_strided_slice %5 {offsets = [0, 208], sizes = [2, 256], strides = [1, 1]} : vector<2x496xf32> to vector<2x256xf32>
    %c5_i32 = arith.constant 5 : i32
    %170 = vector.broadcast %c5_i32 : i32 to vector<1x256xi32>
    %171 = arith.cmpi sge, %25, %170 : vector<1x256xi32>
    %c21_i32 = arith.constant 21 : i32
    %172 = vector.broadcast %c21_i32 : i32 to vector<1x256xi32>
    %173 = arith.cmpi slt, %25, %172 : vector<1x256xi32>
    %174 = arith.andi %171, %173 : vector<1x256xi1>
    %175 = arith.extui %174 : vector<1x256xi1> to vector<1x256xi32>
    %176 = arith.sitofp %175 : vector<1x256xi32> to vector<1x256xf32>
    %177 = vector.extract_strided_slice %8 {offsets = [0, 2], sizes = [2, 256], strides = [1, 1]} : vector<2x271xf32> to vector<2x256xf32>
    %178 = vector.broadcast %176 : vector<1x256xf32> to vector<2x256xf32>
    %179 = arith.mulf %177, %178 : vector<2x256xf32>
    %180 = vector.extract_strided_slice %5 {offsets = [0, 224], sizes = [2, 256], strides = [1, 1]} : vector<2x496xf32> to vector<2x256xf32>
    %c6_i32 = arith.constant 6 : i32
    %181 = vector.broadcast %c6_i32 : i32 to vector<1x256xi32>
    %182 = arith.cmpi sge, %25, %181 : vector<1x256xi32>
    %c22_i32 = arith.constant 22 : i32
    %183 = vector.broadcast %c22_i32 : i32 to vector<1x256xi32>
    %184 = arith.cmpi slt, %25, %183 : vector<1x256xi32>
    %185 = arith.andi %182, %184 : vector<1x256xi1>
    %186 = arith.extui %185 : vector<1x256xi1> to vector<1x256xi32>
    %187 = arith.sitofp %186 : vector<1x256xi32> to vector<1x256xf32>
    %188 = vector.extract_strided_slice %8 {offsets = [0, 1], sizes = [2, 256], strides = [1, 1]} : vector<2x271xf32> to vector<2x256xf32>
    %189 = vector.broadcast %187 : vector<1x256xf32> to vector<2x256xf32>
    %190 = arith.mulf %188, %189 : vector<2x256xf32>
    %191 = vector.extract_strided_slice %5 {offsets = [0, 240], sizes = [2, 256], strides = [1, 1]} : vector<2x496xf32> to vector<2x256xf32>
    %c7_i32 = arith.constant 7 : i32
    %192 = vector.broadcast %c7_i32 : i32 to vector<1x256xi32>
    %193 = arith.cmpi sge, %25, %192 : vector<1x256xi32>
    %c23_i32 = arith.constant 23 : i32
    %194 = vector.broadcast %c23_i32 : i32 to vector<1x256xi32>
    %195 = arith.cmpi slt, %25, %194 : vector<1x256xi32>
    %196 = arith.andi %193, %195 : vector<1x256xi1>
    %197 = arith.extui %196 : vector<1x256xi1> to vector<1x256xi32>
    %198 = arith.sitofp %197 : vector<1x256xi32> to vector<1x256xf32>
    %199 = vector.extract_strided_slice %8 {offsets = [0, 0], sizes = [2, 256], strides = [1, 1]} : vector<2x271xf32> to vector<2x256xf32>
    %200 = vector.broadcast %198 : vector<1x256xf32> to vector<2x256xf32>
    %201 = arith.mulf %199, %200 : vector<2x256xf32>
    %202 = vector.shape_cast %26 : vector<2x256xf32> to vector<2x1x256xf32>
    %203 = vector.shape_cast %37 : vector<2x256xf32> to vector<2x1x256xf32>
    %204 = vector.shape_cast %48 : vector<2x256xf32> to vector<2x1x256xf32>
    %205 = vector.shape_cast %59 : vector<2x256xf32> to vector<2x1x256xf32>
    %206 = vector.shape_cast %70 : vector<2x256xf32> to vector<2x1x256xf32>
    %207 = vector.shape_cast %81 : vector<2x256xf32> to vector<2x1x256xf32>
    %208 = vector.shape_cast %92 : vector<2x256xf32> to vector<2x1x256xf32>
    %209 = vector.shape_cast %103 : vector<2x256xf32> to vector<2x1x256xf32>
    %210 = vector.shape_cast %114 : vector<2x256xf32> to vector<2x1x256xf32>
    %211 = vector.shape_cast %125 : vector<2x256xf32> to vector<2x1x256xf32>
    %212 = vector.shape_cast %136 : vector<2x256xf32> to vector<2x1x256xf32>
    %213 = vector.shape_cast %147 : vector<2x256xf32> to vector<2x1x256xf32>
    %214 = vector.shape_cast %158 : vector<2x256xf32> to vector<2x1x256xf32>
    %215 = vector.shape_cast %169 : vector<2x256xf32> to vector<2x1x256xf32>
    %216 = vector.shape_cast %180 : vector<2x256xf32> to vector<2x1x256xf32>
    %217 = vector.shape_cast %191 : vector<2x256xf32> to vector<2x1x256xf32>
    %218 = tpu.concatenate %202, %203, %204, %205, %206, %207, %208, %209, %210, %211, %212, %213, %214, %215, %216, %217 in 1 : vector<2x1x256xf32>, vector<2x1x256xf32>, vector<2x1x256xf32>, vector<2x1x256xf32>, vector<2x1x256xf32>, vector<2x1x256xf32>, vector<2x1x256xf32>, vector<2x1x256xf32>, vector<2x1x256xf32>, vector<2x1x256xf32>, vector<2x1x256xf32>, vector<2x1x256xf32>, vector<2x1x256xf32>, vector<2x1x256xf32>, vector<2x1x256xf32>, vector<2x1x256xf32> -> vector<2x16x256xf32>
    %219 = vector.shape_cast %36 : vector<2x256xf32> to vector<2x1x256xf32>
    %220 = vector.shape_cast %47 : vector<2x256xf32> to vector<2x1x256xf32>
    %221 = vector.shape_cast %58 : vector<2x256xf32> to vector<2x1x256xf32>
    %222 = vector.shape_cast %69 : vector<2x256xf32> to vector<2x1x256xf32>
    %223 = vector.shape_cast %80 : vector<2x256xf32> to vector<2x1x256xf32>
    %224 = vector.shape_cast %91 : vector<2x256xf32> to vector<2x1x256xf32>
    %225 = vector.shape_cast %102 : vector<2x256xf32> to vector<2x1x256xf32>
    %226 = vector.shape_cast %113 : vector<2x256xf32> to vector<2x1x256xf32>
    %227 = vector.shape_cast %124 : vector<2x256xf32> to vector<2x1x256xf32>
    %228 = vector.shape_cast %135 : vector<2x256xf32> to vector<2x1x256xf32>
    %229 = vector.shape_cast %146 : vector<2x256xf32> to vector<2x1x256xf32>
    %230 = vector.shape_cast %157 : vector<2x256xf32> to vector<2x1x256xf32>
    %231 = vector.shape_cast %168 : vector<2x256xf32> to vector<2x1x256xf32>
    %232 = vector.shape_cast %179 : vector<2x256xf32> to vector<2x1x256xf32>
    %233 = vector.shape_cast %190 : vector<2x256xf32> to vector<2x1x256xf32>
    %234 = vector.shape_cast %201 : vector<2x256xf32> to vector<2x1x256xf32>
    %235 = tpu.concatenate %219, %220, %221, %222, %223, %224, %225, %226, %227, %228, %229, %230, %231, %232, %233, %234 in 1 : vector<2x1x256xf32>, vector<2x1x256xf32>, vector<2x1x256xf32>, vector<2x1x256xf32>, vector<2x1x256xf32>, vector<2x1x256xf32>, vector<2x1x256xf32>, vector<2x1x256xf32>, vector<2x1x256xf32>, vector<2x1x256xf32>, vector<2x1x256xf32>, vector<2x1x256xf32>, vector<2x1x256xf32>, vector<2x1x256xf32>, vector<2x1x256xf32>, vector<2x1x256xf32> -> vector<2x16x256xf32>
    %cst_13 = arith.constant dense<0.000000e+00> : vector<2x16x16xf32>
    %236 = tpu.matmul %218, %235, %cst_13 {dimension_numbers = #tpu.dot_dimension_numbers<[2], [2], [1], [1], [0, 0, 0, 1, 1, 1], [0], [0]>, precision = #tpu.contract_precision<fp32>} : vector<2x16x256xf32>, vector<2x16x256xf32>, vector<2x16x16xf32> -> vector<2x16x16xf32>
    %237 = vector.shape_cast %2 : vector<16x16xf32> to vector<1x16x16xf32>
    %238 = vector.broadcast %237 : vector<1x16x16xf32> to vector<2x16x16xf32>
    %239 = arith.mulf %236, %238 : vector<2x16x16xf32>
    %c0_14 = arith.constant 0 : index
    %c0_15 = arith.constant 0 : index
    %c0_16 = arith.constant 0 : index
    %c0_17 = arith.constant 0 : index
    %240 = vector.load %arg3[%c0_14, %c0_15, %c0_16, %c0_17] : memref<1x2x16x16xf32, #tpu.memory_space<vmem>>, vector<1x2x16x16xf32>
    %241 = vector.shape_cast %240 : vector<1x2x16x16xf32> to vector<2x16x16xf32>
    %242 = vector.shape_cast %239 : vector<2x16x16xf32> to vector<1x2x16x16xf32>
    tpu.vector_store %arg3[%c0_14, %c0_15, %c0_16, %c0_17], %242 {strides = array<i32>} : memref<1x2x16x16xf32, #tpu.memory_space<vmem>>, vector<1x2x16x16xf32>,
    return
  }
  func.func @transform_0(%arg0: i32) -> (i32, i32, i32) {
    %c0_i32 = arith.constant 0 : i32
    %c0_i32_0 = arith.constant 0 : i32
    %c0_i32_1 = arith.constant 0 : i32
    return %arg0, %c0_i32, %c0_i32_0 : i32, i32, i32
  }
  func.func @transform_1(%arg0: i32) -> (i32, i32) {
    %c0_i32 = arith.constant 0 : i32
    %c0_i32_0 = arith.constant 0 : i32
    %c0_i32_1 = arith.constant 0 : i32
    return %c0_i32, %c0_i32_0 : i32, i32
  }
  func.func @transform_2(%arg0: i32) -> (i32, i32, i32, i32) {
    %c0_i32 = arith.constant 0 : i32
    %c0_i32_0 = arith.constant 0 : i32
    %c0_i32_1 = arith.constant 0 : i32
    %c0_i32_2 = arith.constant 0 : i32
    return %arg0, %c0_i32, %c0_i32_0, %c0_i32_1 : i32, i32, i32, i32
  }
}

</mosaic_0001>

<llo_original>
// kernel: tpu_custom_call.1
$region0: #{tpu_custom_call.1}
  #allocation0 [shape = 'u32[]', space=smem, size = 0x4, offset = 0x4, fixed_abs, tag = 'smem constant byte address 0x4 - core index']
  #allocation1 [shape = 'u32[72,128]{1,0:T(1,128)}', space=vmem, size = 0x9000, scoped, tag = 'internal scratch']
  %s0 = inlined_call_operand.hbm [shape: f32[2,2,256], index: 0, kind: input, shape index: {}]
  %s1 = inlined_call_operand.hbm [shape: f32[16,16], index: 1, kind: input, shape index: {}]
  %s2 = inlined_call_operand.hbm [shape: f32[2,2,16,16], index: 2, kind: output, shape index: {}]
  %s3 = sld [smem:[#allocation0]]
  $region49: #{tpu_custom_call.1} parent=0
    _
  %s5 = ssub.s32 1, %s3
  %s6 = scalar_select 0, %s5, %s3
  $region1: #{tpu_custom_call.1} parent=0
    #allocation2 [shape = 'u8[4096]{0}', space=vmem, size = 0x1000, scoped, tag = 'input window, operand 0']
    #allocation3 [shape = 's32[2]{0}', space=sflag, size = 0x8, scoped, tag = 'scoped memory for tpu_custom_call.1']
    #allocation4 [shape = 's32[2]{0}', space=sflag, size = 0x8, scoped, tag = 'scoped memory for tpu_custom_call.1']
    #allocation5 [shape = 'u8[8192]{0}', space=vmem, size = 0x2000, scoped, tag = 'input window, operand 1, single buffered']
    #allocation6 [shape = 's32[1]{0}', space=sflag, size = 0x4, scoped, tag = 'scoped memory for tpu_custom_call.1']
    #allocation7 [shape = 'u8[32768]{0}', space=vmem, size = 0x8000, scoped, tag = 'output window, operand 0']
    %7 = vsyncpa [#allocation3], 0
    %s8 = scalar_lea.sflag [#allocation3], 1
    %9 = vsyncpa %s8, 0
    %10 = vsyncpa [#allocation6], 0
    %11 = vsyncpa [#allocation4], 0
    %s12 = scalar_lea.sflag [#allocation4], 1
    %13 = vsyncpa %s12, 0
    loop: start=0, step=1, limit=4
    $region2: #{tpu_custom_call.1} parent=1 // loop_pre_header
      _
    $region3: #{tpu_custom_call.1} parent=1 // loop_header
      %s15 = sphi 0, %s19
      %p16 = scmp.ge.s32.totalorder %s15, 4
      %s25 = sphi 0, %s27
      %s28 = sphi 0, %s25
      %s29 = sphi 0, %s28
      %s45 = sphi 0, %s29
      %s49 = sphi 0, %s49
      %s51 = sphi 0, %s49
      %s52 = sphi 0, %s51
      %s66 = sphi 0, %s52
      %s72 = sphi 0, %s74
      %s75 = sphi 0, %s72
      %s76 = sphi 0, %s75
      %s92 = sphi 0, %s76
    $region4: #{tpu_custom_call.1} parent=1 // loop_header_branch
      %18 = sbr.rel (%p16) target = $region8
    $region5: #{tpu_custom_call.1} parent=1 // loop_body
      %s20 = ssub.s32 %s15, 1
      %s21 = ssub.s32 %s15, 2
      %s22 = sadd.s32 %s15, 1
      %s23 = ssub.s32 %s15, %s22
      %p24 = scmp.eq.s32.totalorder %s23, 0
      %s26 = sadd.s32 %s25, 1
      %s27 = scalar_select %p24, %s25, %s26
      %p30 = pneg %p24
      %p31 = scmp.eq.s32.totalorder %s15, 1
      %p32 = por %p30, %p31
      %p33 = scmp.ne.s32.totalorder %s25, %s28
      %p34 = scmp.eq.s32.totalorder %s15, 0
      %p35 = por %p33, %p34
      %p36 = scmp.ne.s32.totalorder %s25, %s28
      %p37 = scmp.eq.s32.totalorder %s20, 1
      %p38 = por %p36, %p37
      %p39 = scmp.ne.s32.totalorder %s28, %s29
      %p40 = scmp.eq.s32.totalorder %s20, 0
      %p41 = por %p39, %p40
      %p42 = scmp.ne.s32.totalorder %s28, %s29
      %p43 = scmp.eq.s32.totalorder %s21, 1
      %p44 = por %p42, %p43
      %p46 = scmp.ne.s32.totalorder %s29, %s45
      %p47 = scmp.eq.s32.totalorder %s21, 0
      %p48 = por %p46, %p47
      %s50 = sadd.s32 %s49, 1
      %p53 = scmp.eq.s32.totalorder %s15, 1
      %p54 = scmp.ne.s32.totalorder %s49, %s51
      %p55 = scmp.eq.s32.totalorder %s15, 0
      %p56 = por %p54, %p55
      %p57 = scmp.ne.s32.totalorder %s49, %s51
      %p58 = scmp.eq.s32.totalorder %s20, 1
      %p59 = por %p57, %p58
      %p60 = scmp.ne.s32.totalorder %s51, %s52
      %p61 = scmp.eq.s32.totalorder %s20, 0
      %p62 = por %p60, %p61
      %p63 = scmp.ne.s32.totalorder %s51, %s52
      %p64 = scmp.eq.s32.totalorder %s21, 1
      %p65 = por %p63, %p64
      %p67 = scmp.ne.s32.totalorder %s52, %s66
      %p68 = scmp.eq.s32.totalorder %s21, 0
      %p69 = por %p67, %p68
      %s70 = ssub.s32 %s15, %s22
      %p71 = scmp.eq.s32.totalorder %s70, 0
      %s73 = sadd.s32 %s72, 1
      %s74 = scalar_select %p71, %s72, %s73
      %p77 = pneg %p71
      %p78 = scmp.eq.s32.totalorder %s15, 1
      %p79 = por %p77, %p78
      %p80 = scmp.ne.s32.totalorder %s72, %s75
      %p81 = scmp.eq.s32.totalorder %s15, 0
      %p82 = por %p80, %p81
      %p83 = scmp.ne.s32.totalorder %s72, %s75
      %p84 = scmp.eq.s32.totalorder %s20, 1
      %p85 = por %p83, %p84
      %p86 = scmp.ne.s32.totalorder %s75, %s76
      %p87 = scmp.eq.s32.totalorder %s20, 0
      %p88 = por %p86, %p87
      %p89 = scmp.ne.s32.totalorder %s75, %s76
      %p90 = scmp.eq.s32.totalorder %s21, 1
      %p91 = por %p89, %p90
      %p93 = scmp.ne.s32.totalorder %s76, %s92
      %p94 = scmp.eq.s32.totalorder %s21, 0
      %p95 = por %p93, %p94
      %p96 = scmp.le.s32.totalorder 1, %s15
      %p97 = scmp.lt.s32.totalorder %s15, 3
      %p98 = pnand %p96, %p97
      %p99 = pneg %p98
      // Predicated region
      $region9: #{tpu_custom_call.1} parent=5 // pred_check
        _
      $region10: #{tpu_custom_call.1} parent=5 // pred_check_branch
        %101 = sbr.rel (%p98) target = $region12
      $region11: #{tpu_custom_call.1} parent=5 // pred_region
        %s102 = ssub.s32 %s15, 1
        // Predicated region
        $region13: #{tpu_custom_call.1} parent=11 // pred_check
          %p103 = pneg %p62
        $region14: #{tpu_custom_call.1} parent=11 // pred_check_branch
          %105 = sbr.rel (%p103) target = $region16
        $region15: #{tpu_custom_call.1} parent=11 // pred_region
          %107 = vsyncadd [#allocation6], 0
          %s108 = sshll.u32 %s1, 4
          %s109 = int_to_ptr.hbm [resolvable:$true] %s108
          %s110 = sshll.u32 [#allocation5], 4
          %s111 = int_to_ptr.vmem [resolvable:$true] %s110
          %116 = dma.hbm_to_vmem [thread:$0]  %s109, 256, %s111, [#allocation6], 128, 128, 8
        $region16: #{tpu_custom_call.1} parent=11 // pred_fallthru
          _
      $region12: #{tpu_custom_call.1} parent=5 // pred_fallthru
        _
      %p117 = scmp.lt.s32.totalorder %s15, 2
      // Predicated region
      $region17: #{tpu_custom_call.1} parent=5 // pred_check
        %p118 = pneg %p117
      $region18: #{tpu_custom_call.1} parent=5 // pred_check_branch
        %120 = sbr.rel (%p118) target = $region20
      $region19: #{tpu_custom_call.1} parent=5 // pred_region
        // Predicated region
        $region21: #{tpu_custom_call.1} parent=19 // pred_check
          %p121 = pneg %p35
        $region22: #{tpu_custom_call.1} parent=19 // pred_check_branch
          %123 = sbr.rel (%p121) target = $region24
        $region23: #{tpu_custom_call.1} parent=19 // pred_region
          %s124 = sand.u32 %s25, 1
          %s125 = scalar_lea.sflag [#allocation3], %s124
          %s126 = sand.u32 %s25, 1
          %s127 = smul.addr %s126, 4
          %s128 = scalar_lea.vmem [#allocation2], %s127
          %130 = vsyncadd %s125, 0
          %s131 = smul.addr %s15, 2
          %s132 = smul.addr %s131, 2
          %s133 = scalar_lea.hbm %s0, %s132
          %s135 = sshll.u32 %s133, 4
          %s136 = int_to_ptr.hbm [resolvable:$true] %s135
          %s137 = sshll.u32 %s128, 4
          %s138 = int_to_ptr.vmem [resolvable:$true] %s137
          %140 = dma.hbm_to_vmem [thread:$0]  %s136, 64, %s138, %s125
        $region24: #{tpu_custom_call.1} parent=19 // pred_fallthru
          _
      $region20: #{tpu_custom_call.1} parent=5 // pred_fallthru
        _
      %p141 = scmp.le.s32.totalorder 1, %s15
      %p142 = scmp.lt.s32.totalorder %s15, 3
      %p143 = pnand %p141, %p142
      %p144 = pneg %p143
      // Predicated region
      $region25: #{tpu_custom_call.1} parent=5 // pred_check
        _
      $region26: #{tpu_custom_call.1} parent=5 // pred_check_branch
        %146 = sbr.rel (%p143) target = $region28
      $region27: #{tpu_custom_call.1} parent=5 // pred_region
        %s147 = ssub.s32 %s15, 1
        %s148 = sand.u32 %s28, 1
        %s149 = scalar_lea.sflag [#allocation3], %s148
        %s150 = sand.u32 %s28, 1
        %s151 = smul.addr %s150, 4
        %s152 = scalar_lea.vmem [#allocation2], %s151
        // Predicated region
        $region29: #{tpu_custom_call.1} parent=27 // pred_check
          %p153 = pneg %p41
        $region30: #{tpu_custom_call.1} parent=27 // pred_check_branch
          %155 = sbr.rel (%p153) target = $region32
        $region31: #{tpu_custom_call.1} parent=27 // pred_region
          %157 = dma.done %s149, 64
        $region32: #{tpu_custom_call.1} parent=27 // pred_fallthru
          _
        // Predicated region
        $region33: #{tpu_custom_call.1} parent=27 // pred_check
          %p158 = pneg %p62
        $region34: #{tpu_custom_call.1} parent=27 // pred_check_branch
          %160 = sbr.rel (%p158) target = $region36
        $region35: #{tpu_custom_call.1} parent=27 // pred_region
          %162 = dma.done [#allocation6], 256
        $region36: #{tpu_custom_call.1} parent=27 // pred_fallthru
          _
        %s163 = sand.u32 %s28, 1
        %s164 = scalar_lea.sflag [#allocation3], %s163
        %s165 = sand.u32 %s28, 1
        %s166 = smul.addr %s165, 4
        %s167 = scalar_lea.vmem [#allocation2], %s166
        %p168 = pneg %p41
        %p169 = pneg %p38
        %p170 = pneg %p62
        %p171 = pneg %p59
        %p172 = pneg %p88
        %p173 = pneg %p85
        %s174 = sand.u32 %s75, 1
        %s175 = scalar_lea.sflag [#allocation4], %s174
        %s176 = sand.u32 %s75, 1
        %s177 = smul.addr %s176, 32
        %s178 = scalar_lea.vmem [#allocation7], %s177
        %v179 = vld [vmem:[%s152] sm:$0xf]
        %v180 = vld [vmem:[#allocation5] sm:$0xff]
        %v181 = vld [vmem:[#allocation5 + $0x8] sm:$0xff]
        %183 = vst [vmem:[#allocation1] ss:$4 sm:$0xff] %v179
        %v184 = vld.sshfl [vmem:[#allocation1] sm:$0xff pattern:$0x73625140]
        %v185 = vld.sshfl [vmem:[#allocation1 + $0x8] sm:$0xff pattern:$0x73625140]
        %186 = vst [vmem:[#allocation1] ss:$4 sm:$0xff] %v179
        %v187 = vld.sshfl [vmem:[#allocation1] sm:$0xff pattern:$0x73625140]
        %v188 = vld.sshfl [vmem:[#allocation1 + $0x8] sm:$0xff pattern:$0x73625140]
        %189 = vrot.lane.b32.xlu0 %v187, 7
        %v190 = vpop.permute.xlu0 %189
        %191 = vrot.lane.b32.xlu0 %v188, 7
        %v192 = vpop.permute.xlu0 %191
        %vm193 = vcmask 56320
        %v194 = vsel %vm193, %v190, %v192
        %v198 = vsel %vm193, 0.0, %v190
        %v199 = vsel %vm193, %v192, 0.0
        %v200 = vlaneseq
        %v201 = vand.u32 %v200, 127
        %v202 = vadd.s32 %v201, 128
        %vm203 = vcmp.lt.s32.totalorder %v201, 0
        %v204 = vsub.s32 0, %v201
        %v205 = vsel %vm203, %v204, %v201
        %v206 = vshrl.u32 %v205, 4
        %v207 = vand.u32 %v205, 15
        %v208 = vsub.s32 0, %v207
        %v209 = vsel %vm203, %v208, %v207
        %vm210 = vcmp.lt.s32.totalorder %v202, 0
        %v211 = vsub.s32 0, %v202
        %v212 = vsel %vm210, %v211, %v202
        %v213 = vshrl.u32 %v212, 4
        %v214 = vand.u32 %v212, 15
        %v215 = vsub.s32 0, %v214
        %v216 = vsel %vm210, %v215, %v214
        %vm217 = vcmp.ne.s32.totalorder %v209, 0
        %vm218 = vcmp.ne.s32.totalorder %v216, 0
        %vm219 = vcmp.lt.s32.totalorder %v209, 0
        %vm220 = vcmp.lt.s32.totalorder %v216, 0
        %vm221 = vmand %vm219, %vm217
        %vm222 = vmand %vm220, %vm218
        %v223 = vadd.s32 %v209, 16
        %v224 = vadd.s32 %v216, 16
        %v225 = vsel %vm221, %v223, %v209
        %v226 = vsel %vm222, %v224, %v216
        %vm227 = vcmp.ge.s32.totalorder %v225, 4294967288
        %vm228 = vcmp.ge.s32.totalorder %v226, 4294967288
        %vm229 = vcmp.lt.s32.totalorder %v225, 8
        %vm230 = vcmp.lt.s32.totalorder %v226, 8
        %vm231 = vmand %vm227, %vm229
        %vm232 = vmand %vm228, %vm230
        %v233 = vsel %vm231, 1, 0
        %v234 = vsel %vm232, 1, 0
        %v235 = vcvt.s32.f32 %v233
        %v236 = vcvt.s32.f32 %v234
        %239 = vrot.lane.b32.xlu0 %v235, 15
        %v240 = vpop.permute.xlu0 %239
        %241 = vrot.lane.b32.xlu0 %v236, 15
        %v242 = vpop.permute.xlu0 %241
        %vm243 = vcmask 121856
        %v244 = vsel %vm243, %v240, %v242
        %v248 = vmul.f32 %v198, %v240
        %v249 = vmul.f32 %v194, %v244
        %v250 = vmul.f32 %v199, %v242
        %vm251 = vcmp.ge.s32.totalorder %v225, 4294967289
        %vm252 = vcmp.ge.s32.totalorder %v226, 4294967289
        %vm253 = vcmp.lt.s32.totalorder %v225, 9
        %vm254 = vcmp.lt.s32.totalorder %v226, 9
        %vm255 = vmand %vm251, %vm253
        %vm256 = vmand %vm252, %vm254
        %v257 = vsel %vm255, 1, 0
        %v258 = vsel %vm256, 1, 0
        %v259 = vcvt.s32.f32 %v257
        %v260 = vcvt.s32.f32 %v258
        %263 = vrot.lane.b32.xlu0 %v259, 14
        %v264 = vpop.permute.xlu0 %263
        %265 = vrot.lane.b32.xlu0 %v260, 14
        %v266 = vpop.permute.xlu0 %265
        %vm267 = vcmask 113664
        %v268 = vsel %vm267, %v264, %v266
        %v272 = vmul.f32 %v198, %v264
        %v273 = vmul.f32 %v194, %v268
        %v274 = vmul.f32 %v199, %v266
        %vm275 = vcmp.ge.s32.totalorder %v225, 4294967290
        %vm276 = vcmp.ge.s32.totalorder %v226, 4294967290
        %vm277 = vcmp.lt.s32.totalorder %v225, 10
        %vm278 = vcmp.lt.s32.totalorder %v226, 10
        %vm279 = vmand %vm275, %vm277
        %vm280 = vmand %vm276, %vm278
        %v281 = vsel %vm279, 1, 0
        %v282 = vsel %vm280, 1, 0
        %v283 = vcvt.s32.f32 %v281
        %v284 = vcvt.s32.f32 %v282
        %287 = vrot.lane.b32.xlu0 %v283, 13
        %v288 = vpop.permute.xlu0 %287
        %289 = vrot.lane.b32.xlu0 %v284, 13
        %v290 = vpop.permute.xlu0 %289
        %vm291 = vcmask 105472
        %v292 = vsel %vm291, %v288, %v290
        %v296 = vmul.f32 %v198, %v288
        %v297 = vmul.f32 %v194, %v292
        %v298 = vmul.f32 %v199, %v290
        %vm299 = vcmp.ge.s32.totalorder %v225, 4294967291
        %vm300 = vcmp.ge.s32.totalorder %v226, 4294967291
        %vm301 = vcmp.lt.s32.totalorder %v225, 11
        %vm302 = vcmp.lt.s32.totalorder %v226, 11
        %vm303 = vmand %vm299, %vm301
        %vm304 = vmand %vm300, %vm302
        %v305 = vsel %vm303, 1, 0
        %v306 = vsel %vm304, 1, 0
        %v307 = vcvt.s32.f32 %v305
        %v308 = vcvt.s32.f32 %v306
        %311 = vrot.lane.b32.xlu0 %v307, 12
        %v312 = vpop.permute.xlu0 %311
        %313 = vrot.lane.b32.xlu0 %v308, 12
        %v314 = vpop.permute.xlu0 %313
        %vm315 = vcmask 97280
        %v316 = vsel %vm315, %v312, %v314
        %v320 = vmul.f32 %v198, %v312
        %v321 = vmul.f32 %v194, %v316
        %v322 = vmul.f32 %v199, %v314
        %vm323 = vcmp.ge.s32.totalorder %v225, 4294967292
        %vm324 = vcmp.ge.s32.totalorder %v226, 4294967292
        %vm325 = vcmp.lt.s32.totalorder %v225, 12
        %vm326 = vcmp.lt.s32.totalorder %v226, 12
        %vm327 = vmand %vm323, %vm325
        %vm328 = vmand %vm324, %vm326
        %v329 = vsel %vm327, 1, 0
        %v330 = vsel %vm328, 1, 0
        %v331 = vcvt.s32.f32 %v329
        %v332 = vcvt.s32.f32 %v330
        %335 = vrot.lane.b32.xlu0 %v331, 11
        %v336 = vpop.permute.xlu0 %335
        %337 = vrot.lane.b32.xlu0 %v332, 11
        %v338 = vpop.permute.xlu0 %337
        %vm339 = vcmask 89088
        %v340 = vsel %vm339, %v336, %v338
        %v344 = vmul.f32 %v198, %v336
        %v345 = vmul.f32 %v194, %v340
        %v346 = vmul.f32 %v199, %v338
        %vm347 = vcmp.ge.s32.totalorder %v225, 4294967293
        %vm348 = vcmp.ge.s32.totalorder %v226, 4294967293
        %vm349 = vcmp.lt.s32.totalorder %v225, 13
        %vm350 = vcmp.lt.s32.totalorder %v226, 13
        %vm351 = vmand %vm347, %vm349
        %vm352 = vmand %vm348, %vm350
        %v353 = vsel %vm351, 1, 0
        %v354 = vsel %vm352, 1, 0
        %v355 = vcvt.s32.f32 %v353
        %v356 = vcvt.s32.f32 %v354
        %359 = vrot.lane.b32.xlu0 %v355, 10
        %v360 = vpop.permute.xlu0 %359
        %361 = vrot.lane.b32.xlu0 %v356, 10
        %v362 = vpop.permute.xlu0 %361
        %vm363 = vcmask 80896
        %v364 = vsel %vm363, %v360, %v362
        %v368 = vmul.f32 %v198, %v360
        %v369 = vmul.f32 %v194, %v364
        %v370 = vmul.f32 %v199, %v362
        %vm371 = vcmp.ge.s32.totalorder %v225, 4294967294
        %vm372 = vcmp.ge.s32.totalorder %v226, 4294967294
        %vm373 = vcmp.lt.s32.totalorder %v225, 14
        %vm374 = vcmp.lt.s32.totalorder %v226, 14
        %vm375 = vmand %vm371, %vm373
        %vm376 = vmand %vm372, %vm374
        %v377 = vsel %vm375, 1, 0
        %v378 = vsel %vm376, 1, 0
        %v379 = vcvt.s32.f32 %v377
        %v380 = vcvt.s32.f32 %v378
        %383 = vrot.lane.b32.xlu0 %v379, 9
        %v384 = vpop.permute.xlu0 %383
        %385 = vrot.lane.b32.xlu0 %v380, 9
        %v386 = vpop.permute.xlu0 %385
        %vm387 = vcmask 72704
        %v388 = vsel %vm387, %v384, %v386
        %v392 = vmul.f32 %v198, %v384
        %v393 = vmul.f32 %v194, %v388
        %v394 = vmul.f32 %v199, %v386
        %vm395 = vcmp.ge.s32.totalorder %v225, 4294967295
        %vm396 = vcmp.ge.s32.totalorder %v226, 4294967295
        %vm397 = vcmp.lt.s32.totalorder %v225, 15
        %vm398 = vcmp.lt.s32.totalorder %v226, 15
        %vm399 = vmand %vm395, %vm397
        %vm400 = vmand %vm396, %vm398
        %v401 = vsel %vm399, 1, 0
        %v402 = vsel %vm400, 1, 0
        %v403 = vcvt.s32.f32 %v401
        %v404 = vcvt.s32.f32 %v402
        %407 = vrot.lane.b32.xlu0 %v403, 8
        %v408 = vpop.permute.xlu0 %407
        %409 = vrot.lane.b32.xlu0 %v404, 8
        %v410 = vpop.permute.xlu0 %409
        %vm411 = vcmask 64512
        %v412 = vsel %vm411, %v408, %v410
        %v416 = vmul.f32 %v198, %v408
        %v417 = vmul.f32 %v194, %v412
        %v418 = vmul.f32 %v199, %v410
        %vm419 = vcmp.ge.s32.totalorder %v225, 0
        %vm420 = vcmp.ge.s32.totalorder %v226, 0
        %vm421 = vcmp.lt.s32.totalorder %v225, 16
        %vm422 = vcmp.lt.s32.totalorder %v226, 16
        %vm423 = vmand %vm419, %vm421
        %vm424 = vmand %vm420, %vm422
        %v425 = vsel %vm423, 1, 0
        %v426 = vsel %vm424, 1, 0
        %v427 = vcvt.s32.f32 %v425
        %v428 = vcvt.s32.f32 %v426
        %431 = vrot.lane.b32.xlu0 %v427, 7
        %v432 = vpop.permute.xlu0 %431
        %433 = vrot.lane.b32.xlu0 %v428, 7
        %v434 = vpop.permute.xlu0 %433
        %v435 = vsel %vm193, %v432, %v434
        %v439 = vmul.f32 %v198, %v432
        %v440 = vmul.f32 %v194, %v435
        %v441 = vmul.f32 %v199, %v434
        %vm442 = vcmp.ge.s32.totalorder %v225, 1
        %vm443 = vcmp.ge.s32.totalorder %v226, 1
        %vm444 = vcmp.lt.s32.totalorder %v225, 17
        %vm445 = vcmp.lt.s32.totalorder %v226, 17
        %vm446 = vmand %vm442, %vm444
        %vm447 = vmand %vm443, %vm445
        %v448 = vsel %vm446, 1, 0
        %v449 = vsel %vm447, 1, 0
        %v450 = vcvt.s32.f32 %v448
        %v451 = vcvt.s32.f32 %v449
        %454 = vrot.lane.b32.xlu0 %v450, 6
        %v455 = vpop.permute.xlu0 %454
        %456 = vrot.lane.b32.xlu0 %v451, 6
        %v457 = vpop.permute.xlu0 %456
        %vm458 = vcmask 48128
        %v459 = vsel %vm458, %v455, %v457
        %v463 = vmul.f32 %v198, %v455
        %v464 = vmul.f32 %v194, %v459
        %v465 = vmul.f32 %v199, %v457
        %vm466 = vcmp.ge.s32.totalorder %v225, 2
        %vm467 = vcmp.ge.s32.totalorder %v226, 2
        %vm468 = vcmp.lt.s32.totalorder %v225, 18
        %vm469 = vcmp.lt.s32.totalorder %v226, 18
        %vm470 = vmand %vm466, %vm468
        %vm471 = vmand %vm467, %vm469
        %v472 = vsel %vm470, 1, 0
        %v473 = vsel %vm471, 1, 0
        %v474 = vcvt.s32.f32 %v472
        %v475 = vcvt.s32.f32 %v473
        %478 = vrot.lane.b32.xlu0 %v474, 5
        %v479 = vpop.permute.xlu0 %478
        %480 = vrot.lane.b32.xlu0 %v475, 5
        %v481 = vpop.permute.xlu0 %480
        %vm482 = vcmask 39936
        %v483 = vsel %vm482, %v479, %v481
        %v487 = vmul.f32 %v198, %v479
        %v488 = vmul.f32 %v194, %v483
        %v489 = vmul.f32 %v199, %v481
        %vm490 = vcmp.ge.s32.totalorder %v225, 3
        %vm491 = vcmp.ge.s32.totalorder %v226, 3
        %vm492 = vcmp.lt.s32.totalorder %v225, 19
        %vm493 = vcmp.lt.s32.totalorder %v226, 19
        %vm494 = vmand %vm490, %vm492
        %vm495 = vmand %vm491, %vm493
        %v496 = vsel %vm494, 1, 0
        %v497 = vsel %vm495, 1, 0
        %v498 = vcvt.s32.f32 %v496
        %v499 = vcvt.s32.f32 %v497
        %502 = vrot.lane.b32.xlu0 %v498, 4
        %v503 = vpop.permute.xlu0 %502
        %504 = vrot.lane.b32.xlu0 %v499, 4
        %v505 = vpop.permute.xlu0 %504
        %vm506 = vcmask 31744
        %v507 = vsel %vm506, %v503, %v505
        %v511 = vmul.f32 %v198, %v503
        %v512 = vmul.f32 %v194, %v507
        %v513 = vmul.f32 %v199, %v505
        %vm514 = vcmp.ge.s32.totalorder %v225, 4
        %vm515 = vcmp.ge.s32.totalorder %v226, 4
        %vm516 = vcmp.lt.s32.totalorder %v225, 20
        %vm517 = vcmp.lt.s32.totalorder %v226, 20
        %vm518 = vmand %vm514, %vm516
        %vm519 = vmand %vm515, %vm517
        %v520 = vsel %vm518, 1, 0
        %v521 = vsel %vm519, 1, 0
        %v522 = vcvt.s32.f32 %v520
        %v523 = vcvt.s32.f32 %v521
        %526 = vrot.lane.b32.xlu0 %v522, 3
        %v527 = vpop.permute.xlu0 %526
        %528 = vrot.lane.b32.xlu0 %v523, 3
        %v529 = vpop.permute.xlu0 %528
        %vm530 = vcmask 23552
        %v531 = vsel %vm530, %v527, %v529
        %v535 = vmul.f32 %v198, %v527
        %v536 = vmul.f32 %v194, %v531
        %v537 = vmul.f32 %v199, %v529
        %vm538 = vcmp.ge.s32.totalorder %v225, 5
        %vm539 = vcmp.ge.s32.totalorder %v226, 5
        %vm540 = vcmp.lt.s32.totalorder %v225, 21
        %vm541 = vcmp.lt.s32.totalorder %v226, 21
        %vm542 = vmand %vm538, %vm540
        %vm543 = vmand %vm539, %vm541
        %v544 = vsel %vm542, 1, 0
        %v545 = vsel %vm543, 1, 0
        %v546 = vcvt.s32.f32 %v544
        %v547 = vcvt.s32.f32 %v545
        %550 = vrot.lane.b32.xlu0 %v546, 2
        %v551 = vpop.permute.xlu0 %550
        %552 = vrot.lane.b32.xlu0 %v547, 2
        %v553 = vpop.permute.xlu0 %552
        %vm554 = vcmask 15360
        %v555 = vsel %vm554, %v551, %v553
        %v559 = vmul.f32 %v198, %v551
        %v560 = vmul.f32 %v194, %v555
        %v561 = vmul.f32 %v199, %v553
        %vm562 = vcmp.ge.s32.totalorder %v225, 6
        %vm563 = vcmp.ge.s32.totalorder %v226, 6
        %vm564 = vcmp.lt.s32.totalorder %v225, 22
        %vm565 = vcmp.lt.s32.totalorder %v226, 22
        %vm566 = vmand %vm562, %vm564
        %vm567 = vmand %vm563, %vm565
        %v568 = vsel %vm566, 1, 0
        %v569 = vsel %vm567, 1, 0
        %v570 = vcvt.s32.f32 %v568
        %v571 = vcvt.s32.f32 %v569
        %574 = vrot.lane.b32.xlu0 %v570, 1
        %v575 = vpop.permute.xlu0 %574
        %576 = vrot.lane.b32.xlu0 %v571, 1
        %v577 = vpop.permute.xlu0 %576
        %vm578 = vcmask 7168
        %v579 = vsel %vm578, %v575, %v577
        %v583 = vmul.f32 %v198, %v575
        %v584 = vmul.f32 %v194, %v579
        %v585 = vmul.f32 %v199, %v577
        %vm586 = vcmp.ge.s32.totalorder %v225, 7
        %vm587 = vcmp.ge.s32.totalorder %v226, 7
        %vm588 = vcmp.lt.s32.totalorder %v225, 23
        %vm589 = vcmp.lt.s32.totalorder %v226, 23
        %vm590 = vmand %vm586, %vm588
        %vm591 = vmand %vm587, %vm589
        %v592 = vsel %vm590, 1, 0
        %v593 = vsel %vm591, 1, 0
        %v594 = vcvt.s32.f32 %v592
        %v595 = vcvt.s32.f32 %v593
        %v596 = vmul.f32 %v198, %v594
        %v597 = vmul.f32 %v194, %v595
        %v599 = vrot.slane %v184, 7
        %vm600 = vcmask 1040384
        %v601 = vsel %vm600, 0.0, %v599
        %vm602 = vcmask 1041409
        %v603 = vsel %vm602, 0.0, %v599
        %v604 = vrot.slane %v603, 1
        %v605 = vrot.slane %v185, 6
        %vm606 = vcmask 1041408
        %v607 = vsel %vm606, %v601, %v605
        %vm608 = vcmask 1042433
        %v609 = vsel %vm608, %v603, %v605
        %v610 = vrot.slane %v609, 1
        %v611 = vrot.slane %v185, 7
        %v612 = vsel %vm600, %v184, %v611
        %v613 = vsel %vm602, %v184, %v611
        %v614 = vrot.slane %v613, 1
        %v615 = vrot.slane 0.0, 6
        %v616 = vsel %vm606, %v612, %v615
        %v617 = vsel %vm608, %v613, %v615
        %v618 = vrot.slane %v617, 1
        %v619 = vperm.slane %v601, 0
        %v620 = vperm.slane %v601, 1
        %v621 = vperm.slane %v604, 0
        %v622 = vperm.slane %v604, 1
        %v627 = vperm.slane %v607, 0
        %v628 = vperm.slane %v607, 1
        %v629 = vperm.slane %v607, 2
        %v630 = vperm.slane %v610, 0
        %v631 = vperm.slane %v610, 1
        %v632 = vperm.slane %v610, 2
        %633 = vrot.lane.b32.xlu0 %v627, 112
        %v634 = vpop.permute.xlu0 %633
        %635 = vrot.lane.b32.xlu0 %v628, 112
        %v636 = vpop.permute.xlu0 %635
        %637 = vrot.lane.b32.xlu0 %v629, 112
        %v638 = vpop.permute.xlu0 %637
        %639 = vrot.lane.b32.xlu0 %v630, 112
        %v640 = vpop.permute.xlu0 %639
        %641 = vrot.lane.b32.xlu0 %v631, 112
        %v642 = vpop.permute.xlu0 %641
        %643 = vrot.lane.b32.xlu0 %v632, 112
        %v644 = vpop.permute.xlu0 %643
        %vm645 = vcmask 916480
        %v646 = vsel %vm645, %v634, %v636
        %v647 = vsel %vm645, %v636, %v638
        %v648 = vsel %vm645, %v640, %v642
        %v649 = vsel %vm645, %v642, %v644
        %654 = vrot.lane.b32.xlu0 %v627, 96
        %v655 = vpop.permute.xlu0 %654
        %656 = vrot.lane.b32.xlu0 %v628, 96
        %v657 = vpop.permute.xlu0 %656
        %658 = vrot.lane.b32.xlu0 %v629, 96
        %v659 = vpop.permute.xlu0 %658
        %660 = vrot.lane.b32.xlu0 %v630, 96
        %v661 = vpop.permute.xlu0 %660
        %662 = vrot.lane.b32.xlu0 %v631, 96
        %v663 = vpop.permute.xlu0 %662
        %664 = vrot.lane.b32.xlu0 %v632, 96
        %v665 = vpop.permute.xlu0 %664
        %vm666 = vcmask 785408
        %v667 = vsel %vm666, %v655, %v657
        %v668 = vsel %vm666, %v657, %v659
        %v669 = vsel %vm666, %v661, %v663
        %v670 = vsel %vm666, %v663, %v665
        %675 = vrot.lane.b32.xlu0 %v627, 80
        %v676 = vpop.permute.xlu0 %675
        %677 = vrot.lane.b32.xlu0 %v628, 80
        %v678 = vpop.permute.xlu0 %677
        %679 = vrot.lane.b32.xlu0 %v629, 80
        %v680 = vpop.permute.xlu0 %679
        %681 = vrot.lane.b32.xlu0 %v630, 80
        %v682 = vpop.permute.xlu0 %681
        %683 = vrot.lane.b32.xlu0 %v631, 80
        %v684 = vpop.permute.xlu0 %683
        %685 = vrot.lane.b32.xlu0 %v632, 80
        %v686 = vpop.permute.xlu0 %685
        %vm687 = vcmask 654336
        %v688 = vsel %vm687, %v676, %v678
        %v689 = vsel %vm687, %v678, %v680
        %v690 = vsel %vm687, %v682, %v684
        %v691 = vsel %vm687, %v684, %v686
        %696 = vrot.lane.b32.xlu0 %v627, 64
        %v697 = vpop.permute.xlu0 %696
        %698 = vrot.lane.b32.xlu0 %v628, 64
        %v699 = vpop.permute.xlu0 %698
        %700 = vrot.lane.b32.xlu0 %v629, 64
        %v701 = vpop.permute.xlu0 %700
        %702 = vrot.lane.b32.xlu0 %v630, 64
        %v703 = vpop.permute.xlu0 %702
        %704 = vrot.lane.b32.xlu0 %v631, 64
        %v705 = vpop.permute.xlu0 %704
        %706 = vrot.lane.b32.xlu0 %v632, 64
        %v707 = vpop.permute.xlu0 %706
        %vm708 = vcmask 523264
        %v709 = vsel %vm708, %v697, %v699
        %v710 = vsel %vm708, %v699, %v701
        %v711 = vsel %vm708, %v703, %v705
        %v712 = vsel %vm708, %v705, %v707
        %717 = vrot.lane.b32.xlu0 %v627, 48
        %v718 = vpop.permute.xlu0 %717
        %719 = vrot.lane.b32.xlu0 %v628, 48
        %v720 = vpop.permute.xlu0 %719
        %721 = vrot.lane.b32.xlu0 %v629, 48
        %v722 = vpop.permute.xlu0 %721
        %723 = vrot.lane.b32.xlu0 %v630, 48
        %v724 = vpop.permute.xlu0 %723
        %725 = vrot.lane.b32.xlu0 %v631, 48
        %v726 = vpop.permute.xlu0 %725
        %727 = vrot.lane.b32.xlu0 %v632, 48
        %v728 = vpop.permute.xlu0 %727
        %vm729 = vcmask 392192
        %v730 = vsel %vm729, %v718, %v720
        %v731 = vsel %vm729, %v720, %v722
        %v732 = vsel %vm729, %v724, %v726
        %v733 = vsel %vm729, %v726, %v728
        %738 = vrot.lane.b32.xlu0 %v627, 32
        %v739 = vpop.permute.xlu0 %738
        %740 = vrot.lane.b32.xlu0 %v628, 32
        %v741 = vpop.permute.xlu0 %740
        %742 = vrot.lane.b32.xlu0 %v629, 32
        %v743 = vpop.permute.xlu0 %742
        %744 = vrot.lane.b32.xlu0 %v630, 32
        %v745 = vpop.permute.xlu0 %744
        %746 = vrot.lane.b32.xlu0 %v631, 32
        %v747 = vpop.permute.xlu0 %746
        %748 = vrot.lane.b32.xlu0 %v632, 32
        %v749 = vpop.permute.xlu0 %748
        %vm750 = vcmask 261120
        %v751 = vsel %vm750, %v739, %v741
        %v752 = vsel %vm750, %v741, %v743
        %v753 = vsel %vm750, %v745, %v747
        %v754 = vsel %vm750, %v747, %v749
        %759 = vrot.lane.b32.xlu0 %v627, 16
        %v760 = vpop.permute.xlu0 %759
        %761 = vrot.lane.b32.xlu0 %v628, 16
        %v762 = vpop.permute.xlu0 %761
        %763 = vrot.lane.b32.xlu0 %v629, 16
        %v764 = vpop.permute.xlu0 %763
        %765 = vrot.lane.b32.xlu0 %v630, 16
        %v766 = vpop.permute.xlu0 %765
        %767 = vrot.lane.b32.xlu0 %v631, 16
        %v768 = vpop.permute.xlu0 %767
        %769 = vrot.lane.b32.xlu0 %v632, 16
        %v770 = vpop.permute.xlu0 %769
        %vm771 = vcmask 130048
        %v772 = vsel %vm771, %v760, %v762
        %v773 = vsel %vm771, %v762, %v764
        %v774 = vsel %vm771, %v766, %v768
        %v775 = vsel %vm771, %v768, %v770
        %v780 = vperm.slane %v612, 0
        %v781 = vperm.slane %v612, 1
        %v782 = vperm.slane %v614, 0
        %v783 = vperm.slane %v614, 1
        %v788 = vperm.slane %v616, 0
        %v789 = vperm.slane %v616, 1
        %v790 = vperm.slane %v616, 2
        %v791 = vperm.slane %v618, 0
        %v792 = vperm.slane %v618, 1
        %v793 = vperm.slane %v618, 2
        %794 = vrot.lane.b32.xlu0 %v788, 112
        %v795 = vpop.permute.xlu0 %794
        %796 = vrot.lane.b32.xlu0 %v789, 112
        %v797 = vpop.permute.xlu0 %796
        %798 = vrot.lane.b32.xlu0 %v790, 112
        %v799 = vpop.permute.xlu0 %798
        %800 = vrot.lane.b32.xlu0 %v791, 112
        %v801 = vpop.permute.xlu0 %800
        %802 = vrot.lane.b32.xlu0 %v792, 112
        %v803 = vpop.permute.xlu0 %802
        %804 = vrot.lane.b32.xlu0 %v793, 112
        %v805 = vpop.permute.xlu0 %804
        %v806 = vsel %vm645, %v795, %v797
        %v807 = vsel %vm645, %v797, %v799
        %v808 = vsel %vm645, %v801, %v803
        %v809 = vsel %vm645, %v803, %v805
        %814 = vrot.lane.b32.xlu0 %v788, 96
        %v815 = vpop.permute.xlu0 %814
        %816 = vrot.lane.b32.xlu0 %v789, 96
        %v817 = vpop.permute.xlu0 %816
        %818 = vrot.lane.b32.xlu0 %v790, 96
        %v819 = vpop.permute.xlu0 %818
        %820 = vrot.lane.b32.xlu0 %v791, 96
        %v821 = vpop.permute.xlu0 %820
        %822 = vrot.lane.b32.xlu0 %v792, 96
        %v823 = vpop.permute.xlu0 %822
        %824 = vrot.lane.b32.xlu0 %v793, 96
        %v825 = vpop.permute.xlu0 %824
        %v826 = vsel %vm666, %v815, %v817
        %v827 = vsel %vm666, %v817, %v819
        %v828 = vsel %vm666, %v821, %v823
        %v829 = vsel %vm666, %v823, %v825
        %834 = vrot.lane.b32.xlu0 %v788, 80
        %v835 = vpop.permute.xlu0 %834
        %836 = vrot.lane.b32.xlu0 %v789, 80
        %v837 = vpop.permute.xlu0 %836
        %838 = vrot.lane.b32.xlu0 %v790, 80
        %v839 = vpop.permute.xlu0 %838
        %840 = vrot.lane.b32.xlu0 %v791, 80
        %v841 = vpop.permute.xlu0 %840
        %842 = vrot.lane.b32.xlu0 %v792, 80
        %v843 = vpop.permute.xlu0 %842
        %844 = vrot.lane.b32.xlu0 %v793, 80
        %v845 = vpop.permute.xlu0 %844
        %v846 = vsel %vm687, %v835, %v837
        %v847 = vsel %vm687, %v837, %v839
        %v848 = vsel %vm687, %v841, %v843
        %v849 = vsel %vm687, %v843, %v845
        %854 = vrot.lane.b32.xlu0 %v788, 64
        %v855 = vpop.permute.xlu0 %854
        %856 = vrot.lane.b32.xlu0 %v789, 64
        %v857 = vpop.permute.xlu0 %856
        %858 = vrot.lane.b32.xlu0 %v790, 64
        %v859 = vpop.permute.xlu0 %858
        %860 = vrot.lane.b32.xlu0 %v791, 64
        %v861 = vpop.permute.xlu0 %860
        %862 = vrot.lane.b32.xlu0 %v792, 64
        %v863 = vpop.permute.xlu0 %862
        %864 = vrot.lane.b32.xlu0 %v793, 64
        %v865 = vpop.permute.xlu0 %864
        %v866 = vsel %vm708, %v855, %v857
        %v867 = vsel %vm708, %v857, %v859
        %v868 = vsel %vm708, %v861, %v863
        %v869 = vsel %vm708, %v863, %v865
        %874 = vrot.lane.b32.xlu0 %v788, 48
        %v875 = vpop.permute.xlu0 %874
        %876 = vrot.lane.b32.xlu0 %v789, 48
        %v877 = vpop.permute.xlu0 %876
        %878 = vrot.lane.b32.xlu0 %v790, 48
        %v879 = vpop.permute.xlu0 %878
        %880 = vrot.lane.b32.xlu0 %v791, 48
        %v881 = vpop.permute.xlu0 %880
        %882 = vrot.lane.b32.xlu0 %v792, 48
        %v883 = vpop.permute.xlu0 %882
        %884 = vrot.lane.b32.xlu0 %v793, 48
        %v885 = vpop.permute.xlu0 %884
        %v886 = vsel %vm729, %v875, %v877
        %v887 = vsel %vm729, %v877, %v879
        %v888 = vsel %vm729, %v881, %v883
        %v889 = vsel %vm729, %v883, %v885
        %894 = vrot.lane.b32.xlu0 %v788, 32
        %v895 = vpop.permute.xlu0 %894
        %896 = vrot.lane.b32.xlu0 %v789, 32
        %v897 = vpop.permute.xlu0 %896
        %898 = vrot.lane.b32.xlu0 %v790, 32
        %v899 = vpop.permute.xlu0 %898
        %900 = vrot.lane.b32.xlu0 %v791, 32
        %v901 = vpop.permute.xlu0 %900
        %902 = vrot.lane.b32.xlu0 %v792, 32
        %v903 = vpop.permute.xlu0 %902
        %904 = vrot.lane.b32.xlu0 %v793, 32
        %v905 = vpop.permute.xlu0 %904
        %v906 = vsel %vm750, %v895, %v897
        %v907 = vsel %vm750, %v897, %v899
        %v908 = vsel %vm750, %v901, %v903
        %v909 = vsel %vm750, %v903, %v905
        %914 = vrot.lane.b32.xlu0 %v788, 16
        %v915 = vpop.permute.xlu0 %914
        %916 = vrot.lane.b32.xlu0 %v789, 16
        %v917 = vpop.permute.xlu0 %916
        %918 = vrot.lane.b32.xlu0 %v790, 16
        %v919 = vpop.permute.xlu0 %918
        %920 = vrot.lane.b32.xlu0 %v791, 16
        %v921 = vpop.permute.xlu0 %920
        %922 = vrot.lane.b32.xlu0 %v792, 16
        %v923 = vpop.permute.xlu0 %922
        %924 = vrot.lane.b32.xlu0 %v793, 16
        %v925 = vpop.permute.xlu0 %924
        %v926 = vsel %vm771, %v915, %v917
        %v927 = vsel %vm771, %v917, %v919
        %v928 = vsel %vm771, %v921, %v923
        %v929 = vsel %vm771, %v923, %v925
        %v934 = vsel %vm600, %v619, %v646
        %v935 = vsel %vm600, %v620, %v647
        %v936 = vsel %vm600, %v621, %v648
        %v937 = vsel %vm600, %v622, %v649
        %v938 = vsel %vm606, %v934, %v667
        %v939 = vsel %vm606, %v935, %v668
        %v940 = vsel %vm606, %v936, %v669
        %v941 = vsel %vm606, %v937, %v670
        %vm942 = vcmask 1042432
        %v943 = vsel %vm942, %v938, %v688
        %v944 = vsel %vm942, %v939, %v689
        %v945 = vsel %vm942, %v940, %v690
        %v946 = vsel %vm942, %v941, %v691
        %vm947 = vcmask 1043456
        %v948 = vsel %vm947, %v943, %v709
        %v949 = vsel %vm947, %v944, %v710
        %v950 = vsel %vm947, %v945, %v711
        %v951 = vsel %vm947, %v946, %v712
        %vm952 = vcmask 1044480
        %v953 = vsel %vm952, %v948, %v730
        %v954 = vsel %vm952, %v949, %v731
        %v955 = vsel %vm952, %v950, %v732
        %v956 = vsel %vm952, %v951, %v733
        %vm957 = vcmask 1045504
        %v958 = vsel %vm957, %v953, %v751
        %v959 = vsel %vm957, %v954, %v752
        %v960 = vsel %vm957, %v955, %v753
        %v961 = vsel %vm957, %v956, %v754
        %vm962 = vcmask 1046528
        %v963 = vsel %vm962, %v958, %v772
        %v964 = vsel %vm962, %v959, %v773
        %v965 = vsel %vm962, %v960, %v774
        %v966 = vsel %vm962, %v961, %v775
        %v967 = vsel %vm600, %v780, %v806
        %v968 = vsel %vm600, %v781, %v807
        %v969 = vsel %vm600, %v782, %v808
        %v970 = vsel %vm600, %v783, %v809
        %v971 = vsel %vm606, %v967, %v826
        %v972 = vsel %vm606, %v968, %v827
        %v973 = vsel %vm606, %v969, %v828
        %v974 = vsel %vm606, %v970, %v829
        %v975 = vsel %vm942, %v971, %v846
        %v976 = vsel %vm942, %v972, %v847
        %v977 = vsel %vm942, %v973, %v848
        %v978 = vsel %vm942, %v974, %v849
        %v979 = vsel %vm947, %v975, %v866
        %v980 = vsel %vm947, %v976, %v867
        %v981 = vsel %vm947, %v977, %v868
        %v982 = vsel %vm947, %v978, %v869
        %v983 = vsel %vm952, %v979, %v886
        %v984 = vsel %vm952, %v980, %v887
        %v985 = vsel %vm952, %v981, %v888
        %v986 = vsel %vm952, %v982, %v889
        %v987 = vsel %vm957, %v983, %v906
        %v988 = vsel %vm957, %v984, %v907
        %v989 = vsel %vm957, %v985, %v908
        %v990 = vsel %vm957, %v986, %v909
        %v991 = vsel %vm962, %v987, %v926
        %v992 = vsel %vm962, %v988, %v927
        %v993 = vsel %vm962, %v989, %v928
        %v994 = vsel %vm962, %v990, %v929
        %v998 = vrot.slane %v249, 7
        %v999 = vrot.slane %v250, 6
        %v1000 = vsel %vm600, %v248, %v998
        %v1001 = vsel %vm606, %v1000, %v999
        %v1002 = vsel %vm602, %v248, %v998
        %v1003 = vsel %vm608, %v1002, %v999
        %v1004 = vrot.slane %v1003, 1
        %v1008 = vrot.slane %v273, 7
        %v1009 = vrot.slane %v274, 6
        %v1010 = vsel %vm600, %v272, %v1008
        %v1011 = vsel %vm606, %v1010, %v1009
        %v1012 = vsel %vm602, %v272, %v1008
        %v1013 = vsel %vm608, %v1012, %v1009
        %v1014 = vrot.slane %v1013, 1
        %v1018 = vrot.slane %v297, 7
        %v1019 = vrot.slane %v298, 6
        %v1020 = vsel %vm600, %v296, %v1018
        %v1021 = vsel %vm606, %v1020, %v1019
        %v1022 = vsel %vm602, %v296, %v1018
        %v1023 = vsel %vm608, %v1022, %v1019
        %v1024 = vrot.slane %v1023, 1
        %v1028 = vrot.slane %v321, 7
        %v1029 = vrot.slane %v322, 6
        %v1030 = vsel %vm600, %v320, %v1028
        %v1031 = vsel %vm606, %v1030, %v1029
        %v1032 = vsel %vm602, %v320, %v1028
        %v1033 = vsel %vm608, %v1032, %v1029
        %v1034 = vrot.slane %v1033, 1
        %v1038 = vrot.slane %v345, 7
        %v1039 = vrot.slane %v346, 6
        %v1040 = vsel %vm600, %v344, %v1038
        %v1041 = vsel %vm606, %v1040, %v1039
        %v1042 = vsel %vm602, %v344, %v1038
        %v1043 = vsel %vm608, %v1042, %v1039
        %v1044 = vrot.slane %v1043, 1
        %v1048 = vrot.slane %v369, 7
        %v1049 = vrot.slane %v370, 6
        %v1050 = vsel %vm600, %v368, %v1048
        %v1051 = vsel %vm606, %v1050, %v1049
        %v1052 = vsel %vm602, %v368, %v1048
        %v1053 = vsel %vm608, %v1052, %v1049
        %v1054 = vrot.slane %v1053, 1
        %v1058 = vrot.slane %v393, 7
        %v1059 = vrot.slane %v394, 6
        %v1060 = vsel %vm600, %v392, %v1058
        %v1061 = vsel %vm606, %v1060, %v1059
        %v1062 = vsel %vm602, %v392, %v1058
        %v1063 = vsel %vm608, %v1062, %v1059
        %v1064 = vrot.slane %v1063, 1
        %v1068 = vrot.slane %v417, 7
        %v1069 = vrot.slane %v418, 6
        %v1070 = vsel %vm600, %v416, %v1068
        %v1071 = vsel %vm606, %v1070, %v1069
        %v1072 = vsel %vm602, %v416, %v1068
        %v1073 = vsel %vm608, %v1072, %v1069
        %v1074 = vrot.slane %v1073, 1
        %v1078 = vrot.slane %v440, 7
        %v1079 = vrot.slane %v441, 6
        %v1080 = vsel %vm600, %v439, %v1078
        %v1081 = vsel %vm606, %v1080, %v1079
        %v1082 = vsel %vm602, %v439, %v1078
        %v1083 = vsel %vm608, %v1082, %v1079
        %v1084 = vrot.slane %v1083, 1
        %v1088 = vrot.slane %v464, 7
        %v1089 = vrot.slane %v465, 6
        %v1090 = vsel %vm600, %v463, %v1088
        %v1091 = vsel %vm606, %v1090, %v1089
        %v1092 = vsel %vm602, %v463, %v1088
        %v1093 = vsel %vm608, %v1092, %v1089
        %v1094 = vrot.slane %v1093, 1
        %v1098 = vrot.slane %v488, 7
        %v1099 = vrot.slane %v489, 6
        %v1100 = vsel %vm600, %v487, %v1098
        %v1101 = vsel %vm606, %v1100, %v1099
        %v1102 = vsel %vm602, %v487, %v1098
        %v1103 = vsel %vm608, %v1102, %v1099
        %v1104 = vrot.slane %v1103, 1
        %v1108 = vrot.slane %v512, 7
        %v1109 = vrot.slane %v513, 6
        %v1110 = vsel %vm600, %v511, %v1108
        %v1111 = vsel %vm606, %v1110, %v1109
        %v1112 = vsel %vm602, %v511, %v1108
        %v1113 = vsel %vm608, %v1112, %v1109
        %v1114 = vrot.slane %v1113, 1
        %v1118 = vrot.slane %v536, 7
        %v1119 = vrot.slane %v537, 6
        %v1120 = vsel %vm600, %v535, %v1118
        %v1121 = vsel %vm606, %v1120, %v1119
        %v1122 = vsel %vm602, %v535, %v1118
        %v1123 = vsel %vm608, %v1122, %v1119
        %v1124 = vrot.slane %v1123, 1
        %v1128 = vrot.slane %v560, 7
        %v1129 = vrot.slane %v561, 6
        %v1130 = vsel %vm600, %v559, %v1128
        %v1131 = vsel %vm606, %v1130, %v1129
        %v1132 = vsel %vm602, %v559, %v1128
        %v1133 = vsel %vm608, %v1132, %v1129
        %v1134 = vrot.slane %v1133, 1
        %v1138 = vrot.slane %v584, 7
        %v1139 = vrot.slane %v585, 6
        %v1140 = vsel %vm600, %v583, %v1138
        %v1141 = vsel %vm606, %v1140, %v1139
        %v1142 = vsel %vm602, %v583, %v1138
        %v1143 = vsel %vm608, %v1142, %v1139
        %v1144 = vrot.slane %v1143, 1
        %v1147 = vrot.slane %v597, 7
        %v1148 = vsel %vm600, %v596, %v1147
        %v1149 = vsel %vm602, %v596, %v1147
        %v1150 = vrot.slane %v1149, 1
        %v1151 = vperm.slane %v1001, 0
        %v1152 = vperm.slane %v1001, 1
        %v1153 = vperm.slane %v1001, 2
        %v1154 = vperm.slane %v1004, 0
        %v1155 = vperm.slane %v1004, 1
        %v1156 = vperm.slane %v1004, 2
        %v1163 = vperm.slane %v1011, 0
        %v1164 = vperm.slane %v1011, 1
        %v1165 = vperm.slane %v1011, 2
        %v1166 = vperm.slane %v1014, 0
        %v1167 = vperm.slane %v1014, 1
        %v1168 = vperm.slane %v1014, 2
        %1169 = vrot.lane.b32.xlu0 %v1163, 1
        %v1170 = vpop.permute.xlu0 %1169
        %1171 = vrot.lane.b32.xlu0 %v1164, 1
        %v1172 = vpop.permute.xlu0 %1171
        %1173 = vrot.lane.b32.xlu0 %v1165, 1
        %v1174 = vpop.permute.xlu0 %1173
        %1175 = vrot.lane.b32.xlu0 %v1166, 1
        %v1176 = vpop.permute.xlu0 %1175
        %1177 = vrot.lane.b32.xlu0 %v1167, 1
        %v1178 = vpop.permute.xlu0 %1177
        %1179 = vrot.lane.b32.xlu0 %v1168, 1
        %v1180 = vpop.permute.xlu0 %1179
        %v1181 = vsel %vm578, %v1170, %v1172
        %v1182 = vsel %vm578, %v1172, %v1174
        %v1183 = vsel %vm578, %v1176, %v1178
        %v1184 = vsel %vm578, %v1178, %v1180
        %v1191 = vperm.slane %v1021, 0
        %v1192 = vperm.slane %v1021, 1
        %v1193 = vperm.slane %v1021, 2
        %v1194 = vperm.slane %v1024, 0
        %v1195 = vperm.slane %v1024, 1
        %v1196 = vperm.slane %v1024, 2
        %1197 = vrot.lane.b32.xlu0 %v1191, 2
        %v1198 = vpop.permute.xlu0 %1197
        %1199 = vrot.lane.b32.xlu0 %v1192, 2
        %v1200 = vpop.permute.xlu0 %1199
        %1201 = vrot.lane.b32.xlu0 %v1193, 2
        %v1202 = vpop.permute.xlu0 %1201
        %1203 = vrot.lane.b32.xlu0 %v1194, 2
        %v1204 = vpop.permute.xlu0 %1203
        %1205 = vrot.lane.b32.xlu0 %v1195, 2
        %v1206 = vpop.permute.xlu0 %1205
        %1207 = vrot.lane.b32.xlu0 %v1196, 2
        %v1208 = vpop.permute.xlu0 %1207
        %v1209 = vsel %vm554, %v1198, %v1200
        %v1210 = vsel %vm554, %v1200, %v1202
        %v1211 = vsel %vm554, %v1204, %v1206
        %v1212 = vsel %vm554, %v1206, %v1208
        %v1219 = vperm.slane %v1031, 0
        %v1220 = vperm.slane %v1031, 1
        %v1221 = vperm.slane %v1031, 2
        %v1222 = vperm.slane %v1034, 0
        %v1223 = vperm.slane %v1034, 1
        %v1224 = vperm.slane %v1034, 2
        %1225 = vrot.lane.b32.xlu0 %v1219, 3
        %v1226 = vpop.permute.xlu0 %1225
        %1227 = vrot.lane.b32.xlu0 %v1220, 3
        %v1228 = vpop.permute.xlu0 %1227
        %1229 = vrot.lane.b32.xlu0 %v1221, 3
        %v1230 = vpop.permute.xlu0 %1229
        %1231 = vrot.lane.b32.xlu0 %v1222, 3
        %v1232 = vpop.permute.xlu0 %1231
        %1233 = vrot.lane.b32.xlu0 %v1223, 3
        %v1234 = vpop.permute.xlu0 %1233
        %1235 = vrot.lane.b32.xlu0 %v1224, 3
        %v1236 = vpop.permute.xlu0 %1235
        %v1237 = vsel %vm530, %v1226, %v1228
        %v1238 = vsel %vm530, %v1228, %v1230
        %v1239 = vsel %vm530, %v1232, %v1234
        %v1240 = vsel %vm530, %v1234, %v1236
        %v1247 = vperm.slane %v1041, 0
        %v1248 = vperm.slane %v1041, 1
        %v1249 = vperm.slane %v1041, 2
        %v1250 = vperm.slane %v1044, 0
        %v1251 = vperm.slane %v1044, 1
        %v1252 = vperm.slane %v1044, 2
        %1253 = vrot.lane.b32.xlu0 %v1247, 4
        %v1254 = vpop.permute.xlu0 %1253
        %1255 = vrot.lane.b32.xlu0 %v1248, 4
        %v1256 = vpop.permute.xlu0 %1255
        %1257 = vrot.lane.b32.xlu0 %v1249, 4
        %v1258 = vpop.permute.xlu0 %1257
        %1259 = vrot.lane.b32.xlu0 %v1250, 4
        %v1260 = vpop.permute.xlu0 %1259
        %1261 = vrot.lane.b32.xlu0 %v1251, 4
        %v1262 = vpop.permute.xlu0 %1261
        %1263 = vrot.lane.b32.xlu0 %v1252, 4
        %v1264 = vpop.permute.xlu0 %1263
        %v1265 = vsel %vm506, %v1254, %v1256
        %v1266 = vsel %vm506, %v1256, %v1258
        %v1267 = vsel %vm506, %v1260, %v1262
        %v1268 = vsel %vm506, %v1262, %v1264
        %v1275 = vperm.slane %v1051, 0
        %v1276 = vperm.slane %v1051, 1
        %v1277 = vperm.slane %v1051, 2
        %v1278 = vperm.slane %v1054, 0
        %v1279 = vperm.slane %v1054, 1
        %v1280 = vperm.slane %v1054, 2
        %1281 = vrot.lane.b32.xlu0 %v1275, 5
        %v1282 = vpop.permute.xlu0 %1281
        %1283 = vrot.lane.b32.xlu0 %v1276, 5
        %v1284 = vpop.permute.xlu0 %1283
        %1285 = vrot.lane.b32.xlu0 %v1277, 5
        %v1286 = vpop.permute.xlu0 %1285
        %1287 = vrot.lane.b32.xlu0 %v1278, 5
        %v1288 = vpop.permute.xlu0 %1287
        %1289 = vrot.lane.b32.xlu0 %v1279, 5
        %v1290 = vpop.permute.xlu0 %1289
        %1291 = vrot.lane.b32.xlu0 %v1280, 5
        %v1292 = vpop.permute.xlu0 %1291
        %v1293 = vsel %vm482, %v1282, %v1284
        %v1294 = vsel %vm482, %v1284, %v1286
        %v1295 = vsel %vm482, %v1288, %v1290
        %v1296 = vsel %vm482, %v1290, %v1292
        %v1303 = vperm.slane %v1061, 0
        %v1304 = vperm.slane %v1061, 1
        %v1305 = vperm.slane %v1061, 2
        %v1306 = vperm.slane %v1064, 0
        %v1307 = vperm.slane %v1064, 1
        %v1308 = vperm.slane %v1064, 2
        %1309 = vrot.lane.b32.xlu0 %v1303, 6
        %v1310 = vpop.permute.xlu0 %1309
        %1311 = vrot.lane.b32.xlu0 %v1304, 6
        %v1312 = vpop.permute.xlu0 %1311
        %1313 = vrot.lane.b32.xlu0 %v1305, 6
        %v1314 = vpop.permute.xlu0 %1313
        %1315 = vrot.lane.b32.xlu0 %v1306, 6
        %v1316 = vpop.permute.xlu0 %1315
        %1317 = vrot.lane.b32.xlu0 %v1307, 6
        %v1318 = vpop.permute.xlu0 %1317
        %1319 = vrot.lane.b32.xlu0 %v1308, 6
        %v1320 = vpop.permute.xlu0 %1319
        %v1321 = vsel %vm458, %v1310, %v1312
        %v1322 = vsel %vm458, %v1312, %v1314
        %v1323 = vsel %vm458, %v1316, %v1318
        %v1324 = vsel %vm458, %v1318, %v1320
        %v1331 = vperm.slane %v1071, 0
        %v1332 = vperm.slane %v1071, 1
        %v1333 = vperm.slane %v1071, 2
        %v1334 = vperm.slane %v1074, 0
        %v1335 = vperm.slane %v1074, 1
        %v1336 = vperm.slane %v1074, 2
        %1337 = vrot.lane.b32.xlu0 %v1331, 7
        %v1338 = vpop.permute.xlu0 %1337
        %1339 = vrot.lane.b32.xlu0 %v1332, 7
        %v1340 = vpop.permute.xlu0 %1339
        %1341 = vrot.lane.b32.xlu0 %v1333, 7
        %v1342 = vpop.permute.xlu0 %1341
        %1343 = vrot.lane.b32.xlu0 %v1334, 7
        %v1344 = vpop.permute.xlu0 %1343
        %1345 = vrot.lane.b32.xlu0 %v1335, 7
        %v1346 = vpop.permute.xlu0 %1345
        %1347 = vrot.lane.b32.xlu0 %v1336, 7
        %v1348 = vpop.permute.xlu0 %1347
        %v1349 = vsel %vm193, %v1338, %v1340
        %v1350 = vsel %vm193, %v1340, %v1342
        %v1351 = vsel %vm193, %v1344, %v1346
        %v1352 = vsel %vm193, %v1346, %v1348
        %v1359 = vperm.slane %v1081, 0
        %v1360 = vperm.slane %v1081, 1
        %v1361 = vperm.slane %v1081, 2
        %v1362 = vperm.slane %v1084, 0
        %v1363 = vperm.slane %v1084, 1
        %v1364 = vperm.slane %v1084, 2
        %1365 = vrot.lane.b32.xlu0 %v1359, 8
        %v1366 = vpop.permute.xlu0 %1365
        %1367 = vrot.lane.b32.xlu0 %v1360, 8
        %v1368 = vpop.permute.xlu0 %1367
        %1369 = vrot.lane.b32.xlu0 %v1361, 8
        %v1370 = vpop.permute.xlu0 %1369
        %1371 = vrot.lane.b32.xlu0 %v1362, 8
        %v1372 = vpop.permute.xlu0 %1371
        %1373 = vrot.lane.b32.xlu0 %v1363, 8
        %v1374 = vpop.permute.xlu0 %1373
        %1375 = vrot.lane.b32.xlu0 %v1364, 8
        %v1376 = vpop.permute.xlu0 %1375
        %v1377 = vsel %vm411, %v1366, %v1368
        %v1378 = vsel %vm411, %v1368, %v1370
        %v1379 = vsel %vm411, %v1372, %v1374
        %v1380 = vsel %vm411, %v1374, %v1376
        %v1387 = vperm.slane %v1091, 0
        %v1388 = vperm.slane %v1091, 1
        %v1389 = vperm.slane %v1091, 2
        %v1390 = vperm.slane %v1094, 0
        %v1391 = vperm.slane %v1094, 1
        %v1392 = vperm.slane %v1094, 2
        %1393 = vrot.lane.b32.xlu0 %v1387, 9
        %v1394 = vpop.permute.xlu0 %1393
        %1395 = vrot.lane.b32.xlu0 %v1388, 9
        %v1396 = vpop.permute.xlu0 %1395
        %1397 = vrot.lane.b32.xlu0 %v1389, 9
        %v1398 = vpop.permute.xlu0 %1397
        %1399 = vrot.lane.b32.xlu0 %v1390, 9
        %v1400 = vpop.permute.xlu0 %1399
        %1401 = vrot.lane.b32.xlu0 %v1391, 9
        %v1402 = vpop.permute.xlu0 %1401
        %1403 = vrot.lane.b32.xlu0 %v1392, 9
        %v1404 = vpop.permute.xlu0 %1403
        %v1405 = vsel %vm387, %v1394, %v1396
        %v1406 = vsel %vm387, %v1396, %v1398
        %v1407 = vsel %vm387, %v1400, %v1402
        %v1408 = vsel %vm387, %v1402, %v1404
        %v1415 = vperm.slane %v1101, 0
        %v1416 = vperm.slane %v1101, 1
        %v1417 = vperm.slane %v1101, 2
        %v1418 = vperm.slane %v1104, 0
        %v1419 = vperm.slane %v1104, 1
        %v1420 = vperm.slane %v1104, 2
        %1421 = vrot.lane.b32.xlu0 %v1415, 10
        %v1422 = vpop.permute.xlu0 %1421
        %1423 = vrot.lane.b32.xlu0 %v1416, 10
        %v1424 = vpop.permute.xlu0 %1423
        %1425 = vrot.lane.b32.xlu0 %v1417, 10
        %v1426 = vpop.permute.xlu0 %1425
        %1427 = vrot.lane.b32.xlu0 %v1418, 10
        %v1428 = vpop.permute.xlu0 %1427
        %1429 = vrot.lane.b32.xlu0 %v1419, 10
        %v1430 = vpop.permute.xlu0 %1429
        %1431 = vrot.lane.b32.xlu0 %v1420, 10
        %v1432 = vpop.permute.xlu0 %1431
        %v1433 = vsel %vm363, %v1422, %v1424
        %v1434 = vsel %vm363, %v1424, %v1426
        %v1435 = vsel %vm363, %v1428, %v1430
        %v1436 = vsel %vm363, %v1430, %v1432
        %v1443 = vperm.slane %v1111, 0
        %v1444 = vperm.slane %v1111, 1
        %v1445 = vperm.slane %v1111, 2
        %v1446 = vperm.slane %v1114, 0
        %v1447 = vperm.slane %v1114, 1
        %v1448 = vperm.slane %v1114, 2
        %1449 = vrot.lane.b32.xlu0 %v1443, 11
        %v1450 = vpop.permute.xlu0 %1449
        %1451 = vrot.lane.b32.xlu0 %v1444, 11
        %v1452 = vpop.permute.xlu0 %1451
        %1453 = vrot.lane.b32.xlu0 %v1445, 11
        %v1454 = vpop.permute.xlu0 %1453
        %1455 = vrot.lane.b32.xlu0 %v1446, 11
        %v1456 = vpop.permute.xlu0 %1455
        %1457 = vrot.lane.b32.xlu0 %v1447, 11
        %v1458 = vpop.permute.xlu0 %1457
        %1459 = vrot.lane.b32.xlu0 %v1448, 11
        %v1460 = vpop.permute.xlu0 %1459
        %v1461 = vsel %vm339, %v1450, %v1452
        %v1462 = vsel %vm339, %v1452, %v1454
        %v1463 = vsel %vm339, %v1456, %v1458
        %v1464 = vsel %vm339, %v1458, %v1460
        %v1471 = vperm.slane %v1121, 0
        %v1472 = vperm.slane %v1121, 1
        %v1473 = vperm.slane %v1121, 2
        %v1474 = vperm.slane %v1124, 0
        %v1475 = vperm.slane %v1124, 1
        %v1476 = vperm.slane %v1124, 2
        %1477 = vrot.lane.b32.xlu0 %v1471, 12
        %v1478 = vpop.permute.xlu0 %1477
        %1479 = vrot.lane.b32.xlu0 %v1472, 12
        %v1480 = vpop.permute.xlu0 %1479
        %1481 = vrot.lane.b32.xlu0 %v1473, 12
        %v1482 = vpop.permute.xlu0 %1481
        %1483 = vrot.lane.b32.xlu0 %v1474, 12
        %v1484 = vpop.permute.xlu0 %1483
        %1485 = vrot.lane.b32.xlu0 %v1475, 12
        %v1486 = vpop.permute.xlu0 %1485
        %1487 = vrot.lane.b32.xlu0 %v1476, 12
        %v1488 = vpop.permute.xlu0 %1487
        %v1489 = vsel %vm315, %v1478, %v1480
        %v1490 = vsel %vm315, %v1480, %v1482
        %v1491 = vsel %vm315, %v1484, %v1486
        %v1492 = vsel %vm315, %v1486, %v1488
        %v1499 = vperm.slane %v1131, 0
        %v1500 = vperm.slane %v1131, 1
        %v1501 = vperm.slane %v1131, 2
        %v1502 = vperm.slane %v1134, 0
        %v1503 = vperm.slane %v1134, 1
        %v1504 = vperm.slane %v1134, 2
        %1505 = vrot.lane.b32.xlu0 %v1499, 13
        %v1506 = vpop.permute.xlu0 %1505
        %1507 = vrot.lane.b32.xlu0 %v1500, 13
        %v1508 = vpop.permute.xlu0 %1507
        %1509 = vrot.lane.b32.xlu0 %v1501, 13
        %v1510 = vpop.permute.xlu0 %1509
        %1511 = vrot.lane.b32.xlu0 %v1502, 13
        %v1512 = vpop.permute.xlu0 %1511
        %1513 = vrot.lane.b32.xlu0 %v1503, 13
        %v1514 = vpop.permute.xlu0 %1513
        %1515 = vrot.lane.b32.xlu0 %v1504, 13
        %v1516 = vpop.permute.xlu0 %1515
        %v1517 = vsel %vm291, %v1506, %v1508
        %v1518 = vsel %vm291, %v1508, %v1510
        %v1519 = vsel %vm291, %v1512, %v1514
        %v1520 = vsel %vm291, %v1514, %v1516
        %v1527 = vperm.slane %v1141, 0
        %v1528 = vperm.slane %v1141, 1
        %v1529 = vperm.slane %v1141, 2
        %v1530 = vperm.slane %v1144, 0
        %v1531 = vperm.slane %v1144, 1
        %v1532 = vperm.slane %v1144, 2
        %1533 = vrot.lane.b32.xlu0 %v1527, 14
        %v1534 = vpop.permute.xlu0 %1533
        %1535 = vrot.lane.b32.xlu0 %v1528, 14
        %v1536 = vpop.permute.xlu0 %1535
        %1537 = vrot.lane.b32.xlu0 %v1529, 14
        %v1538 = vpop.permute.xlu0 %1537
        %1539 = vrot.lane.b32.xlu0 %v1530, 14
        %v1540 = vpop.permute.xlu0 %1539
        %1541 = vrot.lane.b32.xlu0 %v1531, 14
        %v1542 = vpop.permute.xlu0 %1541
        %1543 = vrot.lane.b32.xlu0 %v1532, 14
        %v1544 = vpop.permute.xlu0 %1543
        %v1545 = vsel %vm267, %v1534, %v1536
        %v1546 = vsel %vm267, %v1536, %v1538
        %v1547 = vsel %vm267, %v1540, %v1542
        %v1548 = vsel %vm267, %v1542, %v1544
        %v1555 = vperm.slane %v1148, 0
        %v1556 = vperm.slane %v1148, 1
        %v1557 = vperm.slane %v1150, 0
        %v1558 = vperm.slane %v1150, 1
        %1559 = vrot.lane.b32.xlu0 %v1555, 15
        %v1560 = vpop.permute.xlu0 %1559
        %1561 = vrot.lane.b32.xlu0 %v1556, 15
        %v1562 = vpop.permute.xlu0 %1561
        %1563 = vrot.lane.b32.xlu0 %v1557, 15
        %v1564 = vpop.permute.xlu0 %1563
        %1565 = vrot.lane.b32.xlu0 %v1558, 15
        %v1566 = vpop.permute.xlu0 %1565
        %v1567 = vsel %vm243, %v1560, %v1562
        %v1568 = vsel %vm243, %v1564, %v1566
        %v1575 = vsel %vm600, %v1151, %v1170
        %v1576 = vsel %vm600, %v1152, %v1181
        %v1577 = vsel %vm600, %v1153, %v1182
        %v1578 = vsel %vm600, %v1154, %v1176
        %v1579 = vsel %vm600, %v1155, %v1183
        %v1580 = vsel %vm600, %v1156, %v1184
        %v1581 = vsel %vm606, %v1575, %v1198
        %v1582 = vsel %vm606, %v1576, %v1209
        %v1583 = vsel %vm606, %v1577, %v1210
        %v1584 = vsel %vm606, %v1578, %v1204
        %v1585 = vsel %vm606, %v1579, %v1211
        %v1586 = vsel %vm606, %v1580, %v1212
        %v1587 = vsel %vm942, %v1581, %v1226
        %v1588 = vsel %vm942, %v1582, %v1237
        %v1589 = vsel %vm942, %v1583, %v1238
        %v1590 = vsel %vm942, %v1584, %v1232
        %v1591 = vsel %vm942, %v1585, %v1239
        %v1592 = vsel %vm942, %v1586, %v1240
        %v1593 = vsel %vm947, %v1587, %v1254
        %v1594 = vsel %vm947, %v1588, %v1265
        %v1595 = vsel %vm947, %v1589, %v1266
        %v1596 = vsel %vm947, %v1590, %v1260
        %v1597 = vsel %vm947, %v1591, %v1267
        %v1598 = vsel %vm947, %v1592, %v1268
        %v1599 = vsel %vm952, %v1593, %v1282
        %v1600 = vsel %vm952, %v1594, %v1293
        %v1601 = vsel %vm952, %v1595, %v1294
        %v1602 = vsel %vm952, %v1596, %v1288
        %v1603 = vsel %vm952, %v1597, %v1295
        %v1604 = vsel %vm952, %v1598, %v1296
        %v1605 = vsel %vm957, %v1599, %v1310
        %v1606 = vsel %vm957, %v1600, %v1321
        %v1607 = vsel %vm957, %v1601, %v1322
        %v1608 = vsel %vm957, %v1602, %v1316
        %v1609 = vsel %vm957, %v1603, %v1323
        %v1610 = vsel %vm957, %v1604, %v1324
        %v1611 = vsel %vm962, %v1605, %v1338
        %v1612 = vsel %vm962, %v1606, %v1349
        %v1613 = vsel %vm962, %v1607, %v1350
        %v1614 = vsel %vm962, %v1608, %v1344
        %v1615 = vsel %vm962, %v1609, %v1351
        %v1616 = vsel %vm962, %v1610, %v1352
        %v1617 = vsel %vm600, %v1366, %v1394
        %v1618 = vsel %vm600, %v1377, %v1405
        %v1619 = vsel %vm600, %v1378, %v1406
        %v1620 = vsel %vm600, %v1372, %v1400
        %v1621 = vsel %vm600, %v1379, %v1407
        %v1622 = vsel %vm600, %v1380, %v1408
        %v1623 = vsel %vm606, %v1617, %v1422
        %v1624 = vsel %vm606, %v1618, %v1433
        %v1625 = vsel %vm606, %v1619, %v1434
        %v1626 = vsel %vm606, %v1620, %v1428
        %v1627 = vsel %vm606, %v1621, %v1435
        %v1628 = vsel %vm606, %v1622, %v1436
        %v1629 = vsel %vm942, %v1623, %v1450
        %v1630 = vsel %vm942, %v1624, %v1461
        %v1631 = vsel %vm942, %v1625, %v1462
        %v1632 = vsel %vm942, %v1626, %v1456
        %v1633 = vsel %vm942, %v1627, %v1463
        %v1634 = vsel %vm942, %v1628, %v1464
        %v1635 = vsel %vm947, %v1629, %v1478
        %v1636 = vsel %vm947, %v1630, %v1489
        %v1637 = vsel %vm947, %v1631, %v1490
        %v1638 = vsel %vm947, %v1632, %v1484
        %v1639 = vsel %vm947, %v1633, %v1491
        %v1640 = vsel %vm947, %v1634, %v1492
        %v1641 = vsel %vm952, %v1635, %v1506
        %v1642 = vsel %vm952, %v1636, %v1517
        %v1643 = vsel %vm952, %v1637, %v1518
        %v1644 = vsel %vm952, %v1638, %v1512
        %v1645 = vsel %vm952, %v1639, %v1519
        %v1646 = vsel %vm952, %v1640, %v1520
        %v1647 = vsel %vm957, %v1641, %v1534
        %v1648 = vsel %vm957, %v1642, %v1545
        %v1649 = vsel %vm957, %v1643, %v1546
        %v1650 = vsel %vm957, %v1644, %v1540
        %v1651 = vsel %vm957, %v1645, %v1547
        %v1652 = vsel %vm957, %v1646, %v1548
        %v1653 = vsel %vm962, %v1647, %v1560
        %v1654 = vsel %vm962, %v1648, %v1567
        %v1655 = vsel %vm962, %v1649, %v1562
        %v1656 = vsel %vm962, %v1650, %v1564
        %v1657 = vsel %vm962, %v1651, %v1568
        %v1658 = vsel %vm962, %v1652, %v1566
        %1665 = vrot.lane.b32.xlu0 %v1611, 113
        %v1666 = vpop.permute.xlu0 %1665
        %1667 = vrot.lane.b32.xlu0 %v1612, 113
        %v1668 = vpop.permute.xlu0 %1667
        %1669 = vrot.lane.b32.xlu0 %v1613, 113
        %v1670 = vpop.permute.xlu0 %1669
        %1671 = vrot.lane.b32.xlu0 %v1653, 113
        %v1672 = vpop.permute.xlu0 %1671
        %1673 = vrot.lane.b32.xlu0 %v1654, 113
        %v1674 = vpop.permute.xlu0 %1673
        %1675 = vrot.lane.b32.xlu0 %v1655, 113
        %v1676 = vpop.permute.xlu0 %1675
        %vm1677 = vcmask 924672
        %v1678 = vsel %vm1677, %v1666, %v1668
        %v1679 = vsel %vm1677, %v1668, %v1670
        %v1680 = vsel %vm1677, %v1672, %v1674
        %v1681 = vsel %vm1677, %v1674, %v1676
        %1686 = vmatpush.xpose.msra.mxu0 0.0
        %1687 = vmatpush.xpose.msra.mxu0 0.0
        %1688 = vmatpush.xpose.msra.mxu0 0.0
        %1689 = vmatpush.xpose.msra.mxu0 0.0
        %1690 = vmatpush.xpose.msra.mxu0 0.0
        %1691 = vmatpush.xpose.msra.mxu0 0.0
        %1692 = vmatpush.xpose.msra.mxu0 0.0
        %1693 = vmatpush.xpose.msra.mxu0 0.0
        %1694 = vmatpush.xpose.msra.mxu0 0.0
        %1695 = vmatpush.xpose.msra.mxu0 0.0
        %1696 = vmatpush.xpose.msra.mxu0 0.0
        %1697 = vmatpush.xpose.msra.mxu0 0.0
        %1698 = vmatpush.xpose.msra.mxu0 0.0
        %1699 = vmatpush.xpose.msra.mxu0 0.0
        %v1700 = vand.u32 %v1680, 4294901760
        %1701 = vmatpush.xpose.msra.mxu0 %v1700
        %v1702 = vand.u32 %v1678, 4294901760
        %1703 = vmatpush.xpose.msra.mxu0 %v1702
        %v1704 = vand.u32 %v963, 4294901760
        %v1705 = vsub.f32 %v963, %v1704
        %v1706 = vand.u32 %v1705, 4294901760
        %v1707 = vsub.f32 %v1705, %v1706
        %v1708 = vand.u32 %v1707, 4294901760
        %1709 = vmatmul.f32.gmra.mxu0 %v1708
        %v1710 = vpop.f32.mrf.mxu0
        %v1711 = vadd.f32 0.0, %v1710
        %v1712 = vand.u32 %v991, 4294901760
        %v1713 = vsub.f32 %v991, %v1712
        %v1714 = vand.u32 %v1713, 4294901760
        %v1715 = vsub.f32 %v1713, %v1714
        %v1716 = vand.u32 %v1715, 4294901760
        %1717 = vmatmul.f32.gmra.mxu0 %v1716
        %v1718 = vpop.f32.mrf.mxu0
        %v1719 = vadd.f32 0.0, %v1718
        %1720 = vdwg.mxu0
        %1721 = vmatpush.xpose.msra.mxu0 0.0
        %1722 = vmatpush.xpose.msra.mxu0 0.0
        %1723 = vmatpush.xpose.msra.mxu0 0.0
        %1724 = vmatpush.xpose.msra.mxu0 0.0
        %1725 = vmatpush.xpose.msra.mxu0 0.0
        %1726 = vmatpush.xpose.msra.mxu0 0.0
        %1727 = vmatpush.xpose.msra.mxu0 0.0
        %1728 = vmatpush.xpose.msra.mxu0 0.0
        %1729 = vmatpush.xpose.msra.mxu0 0.0
        %1730 = vmatpush.xpose.msra.mxu0 0.0
        %1731 = vmatpush.xpose.msra.mxu0 0.0
        %1732 = vmatpush.xpose.msra.mxu0 0.0
        %1733 = vmatpush.xpose.msra.mxu0 0.0
        %1734 = vmatpush.xpose.msra.mxu0 0.0
        %v1735 = vand.u32 %v1680, 4294901760
        %v1736 = vsub.f32 %v1680, %v1735
        %v1737 = vand.u32 %v1736, 4294901760
        %v1738 = vsub.f32 %v1736, %v1737
        %v1739 = vand.u32 %v1738, 4294901760
        %1740 = vmatpush.xpose.msra.mxu0 %v1739
        %v1741 = vand.u32 %v1678, 4294901760
        %v1742 = vsub.f32 %v1678, %v1741
        %v1743 = vand.u32 %v1742, 4294901760
        %v1744 = vsub.f32 %v1742, %v1743
        %v1745 = vand.u32 %v1744, 4294901760
        %1746 = vmatpush.xpose.msra.mxu0 %v1745
        %v1747 = vand.u32 %v963, 4294901760
        %1748 = vmatmul.f32.gmra.mxu0 %v1747
        %v1749 = vpop.f32.mrf.mxu0
        %v1750 = vadd.f32 %v1711, %v1749
        %v1751 = vand.u32 %v991, 4294901760
        %1752 = vmatmul.f32.gmra.mxu0 %v1751
        %v1753 = vpop.f32.mrf.mxu0
        %v1754 = vadd.f32 %v1719, %v1753
        %1755 = vdwg.mxu0
        %1756 = vmatpush.xpose.msra.mxu0 0.0
        %1757 = vmatpush.xpose.msra.mxu0 0.0
        %1758 = vmatpush.xpose.msra.mxu0 0.0
        %1759 = vmatpush.xpose.msra.mxu0 0.0
        %1760 = vmatpush.xpose.msra.mxu0 0.0
        %1761 = vmatpush.xpose.msra.mxu0 0.0
        %1762 = vmatpush.xpose.msra.mxu0 0.0
        %1763 = vmatpush.xpose.msra.mxu0 0.0
        %1764 = vmatpush.xpose.msra.mxu0 0.0
        %1765 = vmatpush.xpose.msra.mxu0 0.0
        %1766 = vmatpush.xpose.msra.mxu0 0.0
        %1767 = vmatpush.xpose.msra.mxu0 0.0
        %1768 = vmatpush.xpose.msra.mxu0 0.0
        %1769 = vmatpush.xpose.msra.mxu0 0.0
        %v1770 = vand.u32 %v1680, 4294901760
        %v1771 = vsub.f32 %v1680, %v1770
        %1772 = vmatpush.xpose.msra.mxu0 %v1771
        %v1773 = vand.u32 %v1678, 4294901760
        %v1774 = vsub.f32 %v1678, %v1773
        %1775 = vmatpush.xpose.msra.mxu0 %v1774
        %v1776 = vand.u32 %v963, 4294901760
        %v1777 = vsub.f32 %v963, %v1776
        %1778 = vmatmul.f32.gmra.mxu0 %v1777
        %v1779 = vpop.f32.mrf.mxu0
        %v1780 = vadd.f32 %v1750, %v1779
        %v1781 = vand.u32 %v991, 4294901760
        %v1782 = vsub.f32 %v991, %v1781
        %1783 = vmatmul.f32.gmra.mxu0 %v1782
        %v1784 = vpop.f32.mrf.mxu0
        %v1785 = vadd.f32 %v1754, %v1784
        %1786 = vdwg.mxu0
        %1787 = vmatpush.xpose.msra.mxu0 0.0
        %1788 = vmatpush.xpose.msra.mxu0 0.0
        %1789 = vmatpush.xpose.msra.mxu0 0.0
        %1790 = vmatpush.xpose.msra.mxu0 0.0
        %1791 = vmatpush.xpose.msra.mxu0 0.0
        %1792 = vmatpush.xpose.msra.mxu0 0.0
        %1793 = vmatpush.xpose.msra.mxu0 0.0
        %1794 = vmatpush.xpose.msra.mxu0 0.0
        %1795 = vmatpush.xpose.msra.mxu0 0.0
        %1796 = vmatpush.xpose.msra.mxu0 0.0
        %1797 = vmatpush.xpose.msra.mxu0 0.0
        %1798 = vmatpush.xpose.msra.mxu0 0.0
        %1799 = vmatpush.xpose.msra.mxu0 0.0
        %1800 = vmatpush.xpose.msra.mxu0 0.0
        %v1801 = vand.u32 %v1680, 4294901760
        %1802 = vmatpush.xpose.msra.mxu0 %v1801
        %v1803 = vand.u32 %v1678, 4294901760
        %1804 = vmatpush.xpose.msra.mxu0 %v1803
        %v1805 = vand.u32 %v963, 4294901760
        %v1806 = vsub.f32 %v963, %v1805
        %v1807 = vand.u32 %v1806, 4294901760
        %1808 = vmatmul.f32.gmra.mxu0 %v1807
        %v1809 = vpop.f32.mrf.mxu0
        %v1810 = vadd.f32 %v1780, %v1809
        %v1811 = vand.u32 %v991, 4294901760
        %v1812 = vsub.f32 %v991, %v1811
        %v1813 = vand.u32 %v1812, 4294901760
        %1814 = vmatmul.f32.gmra.mxu0 %v1813
        %v1815 = vpop.f32.mrf.mxu0
        %v1816 = vadd.f32 %v1785, %v1815
        %1817 = vdwg.mxu0
        %1818 = vmatpush.xpose.msra.mxu0 0.0
        %1819 = vmatpush.xpose.msra.mxu0 0.0
        %1820 = vmatpush.xpose.msra.mxu0 0.0
        %1821 = vmatpush.xpose.msra.mxu0 0.0
        %1822 = vmatpush.xpose.msra.mxu0 0.0
        %1823 = vmatpush.xpose.msra.mxu0 0.0
        %1824 = vmatpush.xpose.msra.mxu0 0.0
        %1825 = vmatpush.xpose.msra.mxu0 0.0
        %1826 = vmatpush.xpose.msra.mxu0 0.0
        %1827 = vmatpush.xpose.msra.mxu0 0.0
        %1828 = vmatpush.xpose.msra.mxu0 0.0
        %1829 = vmatpush.xpose.msra.mxu0 0.0
        %1830 = vmatpush.xpose.msra.mxu0 0.0
        %1831 = vmatpush.xpose.msra.mxu0 0.0
        %v1832 = vand.u32 %v1680, 4294901760
        %v1833 = vsub.f32 %v1680, %v1832
        %v1834 = vand.u32 %v1833, 4294901760
        %1835 = vmatpush.xpose.msra.mxu0 %v1834
        %v1836 = vand.u32 %v1678, 4294901760
        %v1837 = vsub.f32 %v1678, %v1836
        %v1838 = vand.u32 %v1837, 4294901760
        %1839 = vmatpush.xpose.msra.mxu0 %v1838
        %v1840 = vand.u32 %v963, 4294901760
        %1841 = vmatmul.f32.gmra.mxu0 %v1840
        %v1842 = vpop.f32.mrf.mxu0
        %v1843 = vadd.f32 %v1810, %v1842
        %v1844 = vand.u32 %v991, 4294901760
        %1845 = vmatmul.f32.gmra.mxu0 %v1844
        %v1846 = vpop.f32.mrf.mxu0
        %v1847 = vadd.f32 %v1816, %v1846
        %1848 = vdwg.mxu0
        %1849 = vmatpush.xpose.msra.mxu0 0.0
        %1850 = vmatpush.xpose.msra.mxu0 0.0
        %1851 = vmatpush.xpose.msra.mxu0 0.0
        %1852 = vmatpush.xpose.msra.mxu0 0.0
        %1853 = vmatpush.xpose.msra.mxu0 0.0
        %1854 = vmatpush.xpose.msra.mxu0 0.0
        %1855 = vmatpush.xpose.msra.mxu0 0.0
        %1856 = vmatpush.xpose.msra.mxu0 0.0
        %1857 = vmatpush.xpose.msra.mxu0 0.0
        %1858 = vmatpush.xpose.msra.mxu0 0.0
        %1859 = vmatpush.xpose.msra.mxu0 0.0
        %1860 = vmatpush.xpose.msra.mxu0 0.0
        %1861 = vmatpush.xpose.msra.mxu0 0.0
        %1862 = vmatpush.xpose.msra.mxu0 0.0
        %v1863 = vand.u32 %v1680, 4294901760
        %1864 = vmatpush.xpose.msra.mxu0 %v1863
        %v1865 = vand.u32 %v1678, 4294901760
        %1866 = vmatpush.xpose.msra.mxu0 %v1865
        %v1867 = vand.u32 %v963, 4294901760
        %1868 = vmatmul.f32.gmra.mxu0 %v1867
        %v1869 = vpop.f32.mrf.mxu0
        %v1870 = vadd.f32 %v1843, %v1869
        %v1871 = vand.u32 %v991, 4294901760
        %1872 = vmatmul.f32.gmra.mxu0 %v1871
        %v1873 = vpop.f32.mrf.mxu0
        %v1874 = vadd.f32 %v1847, %v1873
        %1875 = vdwg.mxu0
        %1876 = vmatpush.xpose.msra.mxu0 0.0
        %1877 = vmatpush.xpose.msra.mxu0 0.0
        %1878 = vmatpush.xpose.msra.mxu0 0.0
        %1879 = vmatpush.xpose.msra.mxu0 0.0
        %1880 = vmatpush.xpose.msra.mxu0 0.0
        %1881 = vmatpush.xpose.msra.mxu0 0.0
        %1882 = vmatpush.xpose.msra.mxu0 0.0
        %1883 = vmatpush.xpose.msra.mxu0 0.0
        %1884 = vmatpush.xpose.msra.mxu0 0.0
        %1885 = vmatpush.xpose.msra.mxu0 0.0
        %1886 = vmatpush.xpose.msra.mxu0 0.0
        %1887 = vmatpush.xpose.msra.mxu0 0.0
        %1888 = vmatpush.xpose.msra.mxu0 0.0
        %1889 = vmatpush.xpose.msra.mxu0 0.0
        %v1890 = vand.u32 %v1681, 4294901760
        %1891 = vmatpush.xpose.msra.mxu0 %v1890
        %v1892 = vand.u32 %v1679, 4294901760
        %1893 = vmatpush.xpose.msra.mxu0 %v1892
        %v1894 = vand.u32 %v964, 4294901760
        %v1895 = vsub.f32 %v964, %v1894
        %v1896 = vand.u32 %v1895, 4294901760
        %v1897 = vsub.f32 %v1895, %v1896
        %v1898 = vand.u32 %v1897, 4294901760
        %1899 = vmatmul.f32.gmra.mxu0 %v1898
        %v1900 = vpop.f32.mrf.mxu0
        %v1901 = vadd.f32 %v1870, %v1900
        %v1902 = vand.u32 %v992, 4294901760
        %v1903 = vsub.f32 %v992, %v1902
        %v1904 = vand.u32 %v1903, 4294901760
        %v1905 = vsub.f32 %v1903, %v1904
        %v1906 = vand.u32 %v1905, 4294901760
        %1907 = vmatmul.f32.gmra.mxu0 %v1906
        %v1908 = vpop.f32.mrf.mxu0
        %v1909 = vadd.f32 %v1874, %v1908
        %1910 = vdwg.mxu0
        %1911 = vmatpush.xpose.msra.mxu0 0.0
        %1912 = vmatpush.xpose.msra.mxu0 0.0
        %1913 = vmatpush.xpose.msra.mxu0 0.0
        %1914 = vmatpush.xpose.msra.mxu0 0.0
        %1915 = vmatpush.xpose.msra.mxu0 0.0
        %1916 = vmatpush.xpose.msra.mxu0 0.0
        %1917 = vmatpush.xpose.msra.mxu0 0.0
        %1918 = vmatpush.xpose.msra.mxu0 0.0
        %1919 = vmatpush.xpose.msra.mxu0 0.0
        %1920 = vmatpush.xpose.msra.mxu0 0.0
        %1921 = vmatpush.xpose.msra.mxu0 0.0
        %1922 = vmatpush.xpose.msra.mxu0 0.0
        %1923 = vmatpush.xpose.msra.mxu0 0.0
        %1924 = vmatpush.xpose.msra.mxu0 0.0
        %v1925 = vand.u32 %v1681, 4294901760
        %v1926 = vsub.f32 %v1681, %v1925
        %v1927 = vand.u32 %v1926, 4294901760
        %v1928 = vsub.f32 %v1926, %v1927
        %v1929 = vand.u32 %v1928, 4294901760
        %1930 = vmatpush.xpose.msra.mxu0 %v1929
        %v1931 = vand.u32 %v1679, 4294901760
        %v1932 = vsub.f32 %v1679, %v1931
        %v1933 = vand.u32 %v1932, 4294901760
        %v1934 = vsub.f32 %v1932, %v1933
        %v1935 = vand.u32 %v1934, 4294901760
        %1936 = vmatpush.xpose.msra.mxu0 %v1935
        %v1937 = vand.u32 %v964, 4294901760
        %1938 = vmatmul.f32.gmra.mxu0 %v1937
        %v1939 = vpop.f32.mrf.mxu0
        %v1940 = vadd.f32 %v1901, %v1939
        %v1941 = vand.u32 %v992, 4294901760
        %1942 = vmatmul.f32.gmra.mxu0 %v1941
        %v1943 = vpop.f32.mrf.mxu0
        %v1944 = vadd.f32 %v1909, %v1943
        %1945 = vdwg.mxu0
        %1946 = vmatpush.xpose.msra.mxu0 0.0
        %1947 = vmatpush.xpose.msra.mxu0 0.0
        %1948 = vmatpush.xpose.msra.mxu0 0.0
        %1949 = vmatpush.xpose.msra.mxu0 0.0
        %1950 = vmatpush.xpose.msra.mxu0 0.0
        %1951 = vmatpush.xpose.msra.mxu0 0.0
        %1952 = vmatpush.xpose.msra.mxu0 0.0
        %1953 = vmatpush.xpose.msra.mxu0 0.0
        %1954 = vmatpush.xpose.msra.mxu0 0.0
        %1955 = vmatpush.xpose.msra.mxu0 0.0
        %1956 = vmatpush.xpose.msra.mxu0 0.0
        %1957 = vmatpush.xpose.msra.mxu0 0.0
        %1958 = vmatpush.xpose.msra.mxu0 0.0
        %1959 = vmatpush.xpose.msra.mxu0 0.0
        %v1960 = vand.u32 %v1681, 4294901760
        %v1961 = vsub.f32 %v1681, %v1960
        %1962 = vmatpush.xpose.msra.mxu0 %v1961
        %v1963 = vand.u32 %v1679, 4294901760
        %v1964 = vsub.f32 %v1679, %v1963
        %1965 = vmatpush.xpose.msra.mxu0 %v1964
        %v1966 = vand.u32 %v964, 4294901760
        %v1967 = vsub.f32 %v964, %v1966
        %1968 = vmatmul.f32.gmra.mxu0 %v1967
        %v1969 = vpop.f32.mrf.mxu0
        %v1970 = vadd.f32 %v1940, %v1969
        %v1971 = vand.u32 %v992, 4294901760
        %v1972 = vsub.f32 %v992, %v1971
        %1973 = vmatmul.f32.gmra.mxu0 %v1972
        %v1974 = vpop.f32.mrf.mxu0
        %v1975 = vadd.f32 %v1944, %v1974
        %1976 = vdwg.mxu0
        %1977 = vmatpush.xpose.msra.mxu0 0.0
        %1978 = vmatpush.xpose.msra.mxu0 0.0
        %1979 = vmatpush.xpose.msra.mxu0 0.0
        %1980 = vmatpush.xpose.msra.mxu0 0.0
        %1981 = vmatpush.xpose.msra.mxu0 0.0
        %1982 = vmatpush.xpose.msra.mxu0 0.0
        %1983 = vmatpush.xpose.msra.mxu0 0.0
        %1984 = vmatpush.xpose.msra.mxu0 0.0
        %1985 = vmatpush.xpose.msra.mxu0 0.0
        %1986 = vmatpush.xpose.msra.mxu0 0.0
        %1987 = vmatpush.xpose.msra.mxu0 0.0
        %1988 = vmatpush.xpose.msra.mxu0 0.0
        %1989 = vmatpush.xpose.msra.mxu0 0.0
        %1990 = vmatpush.xpose.msra.mxu0 0.0
        %v1991 = vand.u32 %v1681, 4294901760
        %1992 = vmatpush.xpose.msra.mxu0 %v1991
        %v1993 = vand.u32 %v1679, 4294901760
        %1994 = vmatpush.xpose.msra.mxu0 %v1993
        %v1995 = vand.u32 %v964, 4294901760
        %v1996 = vsub.f32 %v964, %v1995
        %v1997 = vand.u32 %v1996, 4294901760
        %1998 = vmatmul.f32.gmra.mxu0 %v1997
        %v1999 = vpop.f32.mrf.mxu0
        %v2000 = vadd.f32 %v1970, %v1999
        %v2001 = vand.u32 %v992, 4294901760
        %v2002 = vsub.f32 %v992, %v2001
        %v2003 = vand.u32 %v2002, 4294901760
        %2004 = vmatmul.f32.gmra.mxu0 %v2003
        %v2005 = vpop.f32.mrf.mxu0
        %v2006 = vadd.f32 %v1975, %v2005
        %2007 = vdwg.mxu0
        %2008 = vmatpush.xpose.msra.mxu0 0.0
        %2009 = vmatpush.xpose.msra.mxu0 0.0
        %2010 = vmatpush.xpose.msra.mxu0 0.0
        %2011 = vmatpush.xpose.msra.mxu0 0.0
        %2012 = vmatpush.xpose.msra.mxu0 0.0
        %2013 = vmatpush.xpose.msra.mxu0 0.0
        %2014 = vmatpush.xpose.msra.mxu0 0.0
        %2015 = vmatpush.xpose.msra.mxu0 0.0
        %2016 = vmatpush.xpose.msra.mxu0 0.0
        %2017 = vmatpush.xpose.msra.mxu0 0.0
        %2018 = vmatpush.xpose.msra.mxu0 0.0
        %2019 = vmatpush.xpose.msra.mxu0 0.0
        %2020 = vmatpush.xpose.msra.mxu0 0.0
        %2021 = vmatpush.xpose.msra.mxu0 0.0
        %v2022 = vand.u32 %v1681, 4294901760
        %v2023 = vsub.f32 %v1681, %v2022
        %v2024 = vand.u32 %v2023, 4294901760
        %2025 = vmatpush.xpose.msra.mxu0 %v2024
        %v2026 = vand.u32 %v1679, 4294901760
        %v2027 = vsub.f32 %v1679, %v2026
        %v2028 = vand.u32 %v2027, 4294901760
        %2029 = vmatpush.xpose.msra.mxu0 %v2028
        %v2030 = vand.u32 %v964, 4294901760
        %2031 = vmatmul.f32.gmra.mxu0 %v2030
        %v2032 = vpop.f32.mrf.mxu0
        %v2033 = vadd.f32 %v2000, %v2032
        %v2034 = vand.u32 %v992, 4294901760
        %2035 = vmatmul.f32.gmra.mxu0 %v2034
        %v2036 = vpop.f32.mrf.mxu0
        %v2037 = vadd.f32 %v2006, %v2036
        %2038 = vdwg.mxu0
        %2039 = vmatpush.xpose.msra.mxu0 0.0
        %2040 = vmatpush.xpose.msra.mxu0 0.0
        %2041 = vmatpush.xpose.msra.mxu0 0.0
        %2042 = vmatpush.xpose.msra.mxu0 0.0
        %2043 = vmatpush.xpose.msra.mxu0 0.0
        %2044 = vmatpush.xpose.msra.mxu0 0.0
        %2045 = vmatpush.xpose.msra.mxu0 0.0
        %2046 = vmatpush.xpose.msra.mxu0 0.0
        %2047 = vmatpush.xpose.msra.mxu0 0.0
        %2048 = vmatpush.xpose.msra.mxu0 0.0
        %2049 = vmatpush.xpose.msra.mxu0 0.0
        %2050 = vmatpush.xpose.msra.mxu0 0.0
        %2051 = vmatpush.xpose.msra.mxu0 0.0
        %2052 = vmatpush.xpose.msra.mxu0 0.0
        %v2053 = vand.u32 %v1681, 4294901760
        %2054 = vmatpush.xpose.msra.mxu0 %v2053
        %v2055 = vand.u32 %v1679, 4294901760
        %2056 = vmatpush.xpose.msra.mxu0 %v2055
        %v2057 = vand.u32 %v964, 4294901760
        %2058 = vmatmul.f32.gmra.mxu0 %v2057
        %v2059 = vpop.f32.mrf.mxu0
        %v2060 = vadd.f32 %v2033, %v2059
        %v2061 = vand.u32 %v992, 4294901760
        %2062 = vmatmul.f32.gmra.mxu0 %v2061
        %v2063 = vpop.f32.mrf.mxu0
        %v2064 = vadd.f32 %v2037, %v2063
        %2065 = vdwg.mxu0
        %2072 = vrot.lane.b32.xlu0 %v1614, 113
        %v2073 = vpop.permute.xlu0 %2072
        %2074 = vrot.lane.b32.xlu0 %v1615, 113
        %v2075 = vpop.permute.xlu0 %2074
        %2076 = vrot.lane.b32.xlu0 %v1616, 113
        %v2077 = vpop.permute.xlu0 %2076
        %2078 = vrot.lane.b32.xlu0 %v1656, 113
        %v2079 = vpop.permute.xlu0 %2078
        %2080 = vrot.lane.b32.xlu0 %v1657, 113
        %v2081 = vpop.permute.xlu0 %2080
        %2082 = vrot.lane.b32.xlu0 %v1658, 113
        %v2083 = vpop.permute.xlu0 %2082
        %v2084 = vsel %vm1677, %v2073, %v2075
        %v2085 = vsel %vm1677, %v2075, %v2077
        %v2086 = vsel %vm1677, %v2079, %v2081
        %v2087 = vsel %vm1677, %v2081, %v2083
        %2092 = vmatpush.xpose.msra.mxu0 0.0
        %2093 = vmatpush.xpose.msra.mxu0 0.0
        %2094 = vmatpush.xpose.msra.mxu0 0.0
        %2095 = vmatpush.xpose.msra.mxu0 0.0
        %2096 = vmatpush.xpose.msra.mxu0 0.0
        %2097 = vmatpush.xpose.msra.mxu0 0.0
        %2098 = vmatpush.xpose.msra.mxu0 0.0
        %2099 = vmatpush.xpose.msra.mxu0 0.0
        %2100 = vmatpush.xpose.msra.mxu0 0.0
        %2101 = vmatpush.xpose.msra.mxu0 0.0
        %2102 = vmatpush.xpose.msra.mxu0 0.0
        %2103 = vmatpush.xpose.msra.mxu0 0.0
        %2104 = vmatpush.xpose.msra.mxu0 0.0
        %2105 = vmatpush.xpose.msra.mxu0 0.0
        %v2106 = vand.u32 %v2086, 4294901760
        %2107 = vmatpush.xpose.msra.mxu0 %v2106
        %v2108 = vand.u32 %v2084, 4294901760
        %2109 = vmatpush.xpose.msra.mxu0 %v2108
        %v2110 = vand.u32 %v965, 4294901760
        %v2111 = vsub.f32 %v965, %v2110
        %v2112 = vand.u32 %v2111, 4294901760
        %v2113 = vsub.f32 %v2111, %v2112
        %v2114 = vand.u32 %v2113, 4294901760
        %2115 = vmatmul.f32.gmra.mxu0 %v2114
        %v2116 = vpop.f32.mrf.mxu0
        %v2117 = vadd.f32 0.0, %v2116
        %v2118 = vand.u32 %v993, 4294901760
        %v2119 = vsub.f32 %v993, %v2118
        %v2120 = vand.u32 %v2119, 4294901760
        %v2121 = vsub.f32 %v2119, %v2120
        %v2122 = vand.u32 %v2121, 4294901760
        %2123 = vmatmul.f32.gmra.mxu0 %v2122
        %v2124 = vpop.f32.mrf.mxu0
        %v2125 = vadd.f32 0.0, %v2124
        %2126 = vdwg.mxu0
        %2127 = vmatpush.xpose.msra.mxu0 0.0
        %2128 = vmatpush.xpose.msra.mxu0 0.0
        %2129 = vmatpush.xpose.msra.mxu0 0.0
        %2130 = vmatpush.xpose.msra.mxu0 0.0
        %2131 = vmatpush.xpose.msra.mxu0 0.0
        %2132 = vmatpush.xpose.msra.mxu0 0.0
        %2133 = vmatpush.xpose.msra.mxu0 0.0
        %2134 = vmatpush.xpose.msra.mxu0 0.0
        %2135 = vmatpush.xpose.msra.mxu0 0.0
        %2136 = vmatpush.xpose.msra.mxu0 0.0
        %2137 = vmatpush.xpose.msra.mxu0 0.0
        %2138 = vmatpush.xpose.msra.mxu0 0.0
        %2139 = vmatpush.xpose.msra.mxu0 0.0
        %2140 = vmatpush.xpose.msra.mxu0 0.0
        %v2141 = vand.u32 %v2086, 4294901760
        %v2142 = vsub.f32 %v2086, %v2141
        %v2143 = vand.u32 %v2142, 4294901760
        %v2144 = vsub.f32 %v2142, %v2143
        %v2145 = vand.u32 %v2144, 4294901760
        %2146 = vmatpush.xpose.msra.mxu0 %v2145
        %v2147 = vand.u32 %v2084, 4294901760
        %v2148 = vsub.f32 %v2084, %v2147
        %v2149 = vand.u32 %v2148, 4294901760
        %v2150 = vsub.f32 %v2148, %v2149
        %v2151 = vand.u32 %v2150, 4294901760
        %2152 = vmatpush.xpose.msra.mxu0 %v2151
        %v2153 = vand.u32 %v965, 4294901760
        %2154 = vmatmul.f32.gmra.mxu0 %v2153
        %v2155 = vpop.f32.mrf.mxu0
        %v2156 = vadd.f32 %v2117, %v2155
        %v2157 = vand.u32 %v993, 4294901760
        %2158 = vmatmul.f32.gmra.mxu0 %v2157
        %v2159 = vpop.f32.mrf.mxu0
        %v2160 = vadd.f32 %v2125, %v2159
        %2161 = vdwg.mxu0
        %2162 = vmatpush.xpose.msra.mxu0 0.0
        %2163 = vmatpush.xpose.msra.mxu0 0.0
        %2164 = vmatpush.xpose.msra.mxu0 0.0
        %2165 = vmatpush.xpose.msra.mxu0 0.0
        %2166 = vmatpush.xpose.msra.mxu0 0.0
        %2167 = vmatpush.xpose.msra.mxu0 0.0
        %2168 = vmatpush.xpose.msra.mxu0 0.0
        %2169 = vmatpush.xpose.msra.mxu0 0.0
        %2170 = vmatpush.xpose.msra.mxu0 0.0
        %2171 = vmatpush.xpose.msra.mxu0 0.0
        %2172 = vmatpush.xpose.msra.mxu0 0.0
        %2173 = vmatpush.xpose.msra.mxu0 0.0
        %2174 = vmatpush.xpose.msra.mxu0 0.0
        %2175 = vmatpush.xpose.msra.mxu0 0.0
        %v2176 = vand.u32 %v2086, 4294901760
        %v2177 = vsub.f32 %v2086, %v2176
        %2178 = vmatpush.xpose.msra.mxu0 %v2177
        %v2179 = vand.u32 %v2084, 4294901760
        %v2180 = vsub.f32 %v2084, %v2179
        %2181 = vmatpush.xpose.msra.mxu0 %v2180
        %v2182 = vand.u32 %v965, 4294901760
        %v2183 = vsub.f32 %v965, %v2182
        %2184 = vmatmul.f32.gmra.mxu0 %v2183
        %v2185 = vpop.f32.mrf.mxu0
        %v2186 = vadd.f32 %v2156, %v2185
        %v2187 = vand.u32 %v993, 4294901760
        %v2188 = vsub.f32 %v993, %v2187
        %2189 = vmatmul.f32.gmra.mxu0 %v2188
        %v2190 = vpop.f32.mrf.mxu0
        %v2191 = vadd.f32 %v2160, %v2190
        %2192 = vdwg.mxu0
        %2193 = vmatpush.xpose.msra.mxu0 0.0
        %2194 = vmatpush.xpose.msra.mxu0 0.0
        %2195 = vmatpush.xpose.msra.mxu0 0.0
        %2196 = vmatpush.xpose.msra.mxu0 0.0
        %2197 = vmatpush.xpose.msra.mxu0 0.0
        %2198 = vmatpush.xpose.msra.mxu0 0.0
        %2199 = vmatpush.xpose.msra.mxu0 0.0
        %2200 = vmatpush.xpose.msra.mxu0 0.0
        %2201 = vmatpush.xpose.msra.mxu0 0.0
        %2202 = vmatpush.xpose.msra.mxu0 0.0
        %2203 = vmatpush.xpose.msra.mxu0 0.0
        %2204 = vmatpush.xpose.msra.mxu0 0.0
        %2205 = vmatpush.xpose.msra.mxu0 0.0
        %2206 = vmatpush.xpose.msra.mxu0 0.0
        %v2207 = vand.u32 %v2086, 4294901760
        %2208 = vmatpush.xpose.msra.mxu0 %v2207
        %v2209 = vand.u32 %v2084, 4294901760
        %2210 = vmatpush.xpose.msra.mxu0 %v2209
        %v2211 = vand.u32 %v965, 4294901760
        %v2212 = vsub.f32 %v965, %v2211
        %v2213 = vand.u32 %v2212, 4294901760
        %2214 = vmatmul.f32.gmra.mxu0 %v2213
        %v2215 = vpop.f32.mrf.mxu0
        %v2216 = vadd.f32 %v2186, %v2215
        %v2217 = vand.u32 %v993, 4294901760
        %v2218 = vsub.f32 %v993, %v2217
        %v2219 = vand.u32 %v2218, 4294901760
        %2220 = vmatmul.f32.gmra.mxu0 %v2219
        %v2221 = vpop.f32.mrf.mxu0
        %v2222 = vadd.f32 %v2191, %v2221
        %2223 = vdwg.mxu0
        %2224 = vmatpush.xpose.msra.mxu0 0.0
        %2225 = vmatpush.xpose.msra.mxu0 0.0
        %2226 = vmatpush.xpose.msra.mxu0 0.0
        %2227 = vmatpush.xpose.msra.mxu0 0.0
        %2228 = vmatpush.xpose.msra.mxu0 0.0
        %2229 = vmatpush.xpose.msra.mxu0 0.0
        %2230 = vmatpush.xpose.msra.mxu0 0.0
        %2231 = vmatpush.xpose.msra.mxu0 0.0
        %2232 = vmatpush.xpose.msra.mxu0 0.0
        %2233 = vmatpush.xpose.msra.mxu0 0.0
        %2234 = vmatpush.xpose.msra.mxu0 0.0
        %2235 = vmatpush.xpose.msra.mxu0 0.0
        %2236 = vmatpush.xpose.msra.mxu0 0.0
        %2237 = vmatpush.xpose.msra.mxu0 0.0
        %v2238 = vand.u32 %v2086, 4294901760
        %v2239 = vsub.f32 %v2086, %v2238
        %v2240 = vand.u32 %v2239, 4294901760
        %2241 = vmatpush.xpose.msra.mxu0 %v2240
        %v2242 = vand.u32 %v2084, 4294901760
        %v2243 = vsub.f32 %v2084, %v2242
        %v2244 = vand.u32 %v2243, 4294901760
        %2245 = vmatpush.xpose.msra.mxu0 %v2244
        %v2246 = vand.u32 %v965, 4294901760
        %2247 = vmatmul.f32.gmra.mxu0 %v2246
        %v2248 = vpop.f32.mrf.mxu0
        %v2249 = vadd.f32 %v2216, %v2248
        %v2250 = vand.u32 %v993, 4294901760
        %2251 = vmatmul.f32.gmra.mxu0 %v2250
        %v2252 = vpop.f32.mrf.mxu0
        %v2253 = vadd.f32 %v2222, %v2252
        %2254 = vdwg.mxu0
        %2255 = vmatpush.xpose.msra.mxu0 0.0
        %2256 = vmatpush.xpose.msra.mxu0 0.0
        %2257 = vmatpush.xpose.msra.mxu0 0.0
        %2258 = vmatpush.xpose.msra.mxu0 0.0
        %2259 = vmatpush.xpose.msra.mxu0 0.0
        %2260 = vmatpush.xpose.msra.mxu0 0.0
        %2261 = vmatpush.xpose.msra.mxu0 0.0
        %2262 = vmatpush.xpose.msra.mxu0 0.0
        %2263 = vmatpush.xpose.msra.mxu0 0.0
        %2264 = vmatpush.xpose.msra.mxu0 0.0
        %2265 = vmatpush.xpose.msra.mxu0 0.0
        %2266 = vmatpush.xpose.msra.mxu0 0.0
        %2267 = vmatpush.xpose.msra.mxu0 0.0
        %2268 = vmatpush.xpose.msra.mxu0 0.0
        %v2269 = vand.u32 %v2086, 4294901760
        %2270 = vmatpush.xpose.msra.mxu0 %v2269
        %v2271 = vand.u32 %v2084, 4294901760
        %2272 = vmatpush.xpose.msra.mxu0 %v2271
        %v2273 = vand.u32 %v965, 4294901760
        %2274 = vmatmul.f32.gmra.mxu0 %v2273
        %v2275 = vpop.f32.mrf.mxu0
        %v2276 = vadd.f32 %v2249, %v2275
        %v2277 = vand.u32 %v993, 4294901760
        %2278 = vmatmul.f32.gmra.mxu0 %v2277
        %v2279 = vpop.f32.mrf.mxu0
        %v2280 = vadd.f32 %v2253, %v2279
        %2281 = vdwg.mxu0
        %2282 = vmatpush.xpose.msra.mxu0 0.0
        %2283 = vmatpush.xpose.msra.mxu0 0.0
        %2284 = vmatpush.xpose.msra.mxu0 0.0
        %2285 = vmatpush.xpose.msra.mxu0 0.0
        %2286 = vmatpush.xpose.msra.mxu0 0.0
        %2287 = vmatpush.xpose.msra.mxu0 0.0
        %2288 = vmatpush.xpose.msra.mxu0 0.0
        %2289 = vmatpush.xpose.msra.mxu0 0.0
        %2290 = vmatpush.xpose.msra.mxu0 0.0
        %2291 = vmatpush.xpose.msra.mxu0 0.0
        %2292 = vmatpush.xpose.msra.mxu0 0.0
        %2293 = vmatpush.xpose.msra.mxu0 0.0
        %2294 = vmatpush.xpose.msra.mxu0 0.0
        %2295 = vmatpush.xpose.msra.mxu0 0.0
        %v2296 = vand.u32 %v2087, 4294901760
        %2297 = vmatpush.xpose.msra.mxu0 %v2296
        %v2298 = vand.u32 %v2085, 4294901760
        %2299 = vmatpush.xpose.msra.mxu0 %v2298
        %v2300 = vand.u32 %v966, 4294901760
        %v2301 = vsub.f32 %v966, %v2300
        %v2302 = vand.u32 %v2301, 4294901760
        %v2303 = vsub.f32 %v2301, %v2302
        %v2304 = vand.u32 %v2303, 4294901760
        %2305 = vmatmul.f32.gmra.mxu0 %v2304
        %v2306 = vpop.f32.mrf.mxu0
        %v2307 = vadd.f32 %v2276, %v2306
        %v2308 = vand.u32 %v994, 4294901760
        %v2309 = vsub.f32 %v994, %v2308
        %v2310 = vand.u32 %v2309, 4294901760
        %v2311 = vsub.f32 %v2309, %v2310
        %v2312 = vand.u32 %v2311, 4294901760
        %2313 = vmatmul.f32.gmra.mxu0 %v2312
        %v2314 = vpop.f32.mrf.mxu0
        %v2315 = vadd.f32 %v2280, %v2314
        %2316 = vdwg.mxu0
        %2317 = vmatpush.xpose.msra.mxu0 0.0
        %2318 = vmatpush.xpose.msra.mxu0 0.0
        %2319 = vmatpush.xpose.msra.mxu0 0.0
        %2320 = vmatpush.xpose.msra.mxu0 0.0
        %2321 = vmatpush.xpose.msra.mxu0 0.0
        %2322 = vmatpush.xpose.msra.mxu0 0.0
        %2323 = vmatpush.xpose.msra.mxu0 0.0
        %2324 = vmatpush.xpose.msra.mxu0 0.0
        %2325 = vmatpush.xpose.msra.mxu0 0.0
        %2326 = vmatpush.xpose.msra.mxu0 0.0
        %2327 = vmatpush.xpose.msra.mxu0 0.0
        %2328 = vmatpush.xpose.msra.mxu0 0.0
        %2329 = vmatpush.xpose.msra.mxu0 0.0
        %2330 = vmatpush.xpose.msra.mxu0 0.0
        %v2331 = vand.u32 %v2087, 4294901760
        %v2332 = vsub.f32 %v2087, %v2331
        %v2333 = vand.u32 %v2332, 4294901760
        %v2334 = vsub.f32 %v2332, %v2333
        %v2335 = vand.u32 %v2334, 4294901760
        %2336 = vmatpush.xpose.msra.mxu0 %v2335
        %v2337 = vand.u32 %v2085, 4294901760
        %v2338 = vsub.f32 %v2085, %v2337
        %v2339 = vand.u32 %v2338, 4294901760
        %v2340 = vsub.f32 %v2338, %v2339
        %v2341 = vand.u32 %v2340, 4294901760
        %2342 = vmatpush.xpose.msra.mxu0 %v2341
        %v2343 = vand.u32 %v966, 4294901760
        %2344 = vmatmul.f32.gmra.mxu0 %v2343
        %v2345 = vpop.f32.mrf.mxu0
        %v2346 = vadd.f32 %v2307, %v2345
        %v2347 = vand.u32 %v994, 4294901760
        %2348 = vmatmul.f32.gmra.mxu0 %v2347
        %v2349 = vpop.f32.mrf.mxu0
        %v2350 = vadd.f32 %v2315, %v2349
        %2351 = vdwg.mxu0
        %2352 = vmatpush.xpose.msra.mxu0 0.0
        %2353 = vmatpush.xpose.msra.mxu0 0.0
        %2354 = vmatpush.xpose.msra.mxu0 0.0
        %2355 = vmatpush.xpose.msra.mxu0 0.0
        %2356 = vmatpush.xpose.msra.mxu0 0.0
        %2357 = vmatpush.xpose.msra.mxu0 0.0
        %2358 = vmatpush.xpose.msra.mxu0 0.0
        %2359 = vmatpush.xpose.msra.mxu0 0.0
        %2360 = vmatpush.xpose.msra.mxu0 0.0
        %2361 = vmatpush.xpose.msra.mxu0 0.0
        %2362 = vmatpush.xpose.msra.mxu0 0.0
        %2363 = vmatpush.xpose.msra.mxu0 0.0
        %2364 = vmatpush.xpose.msra.mxu0 0.0
        %2365 = vmatpush.xpose.msra.mxu0 0.0
        %v2366 = vand.u32 %v2087, 4294901760
        %v2367 = vsub.f32 %v2087, %v2366
        %2368 = vmatpush.xpose.msra.mxu0 %v2367
        %v2369 = vand.u32 %v2085, 4294901760
        %v2370 = vsub.f32 %v2085, %v2369
        %2371 = vmatpush.xpose.msra.mxu0 %v2370
        %v2372 = vand.u32 %v966, 4294901760
        %v2373 = vsub.f32 %v966, %v2372
        %2374 = vmatmul.f32.gmra.mxu0 %v2373
        %v2375 = vpop.f32.mrf.mxu0
        %v2376 = vadd.f32 %v2346, %v2375
        %v2377 = vand.u32 %v994, 4294901760
        %v2378 = vsub.f32 %v994, %v2377
        %2379 = vmatmul.f32.gmra.mxu0 %v2378
        %v2380 = vpop.f32.mrf.mxu0
        %v2381 = vadd.f32 %v2350, %v2380
        %2382 = vdwg.mxu0
        %2383 = vmatpush.xpose.msra.mxu0 0.0
        %2384 = vmatpush.xpose.msra.mxu0 0.0
        %2385 = vmatpush.xpose.msra.mxu0 0.0
        %2386 = vmatpush.xpose.msra.mxu0 0.0
        %2387 = vmatpush.xpose.msra.mxu0 0.0
        %2388 = vmatpush.xpose.msra.mxu0 0.0
        %2389 = vmatpush.xpose.msra.mxu0 0.0
        %2390 = vmatpush.xpose.msra.mxu0 0.0
        %2391 = vmatpush.xpose.msra.mxu0 0.0
        %2392 = vmatpush.xpose.msra.mxu0 0.0
        %2393 = vmatpush.xpose.msra.mxu0 0.0
        %2394 = vmatpush.xpose.msra.mxu0 0.0
        %2395 = vmatpush.xpose.msra.mxu0 0.0
        %2396 = vmatpush.xpose.msra.mxu0 0.0
        %v2397 = vand.u32 %v2087, 4294901760
        %2398 = vmatpush.xpose.msra.mxu0 %v2397
        %v2399 = vand.u32 %v2085, 4294901760
        %2400 = vmatpush.xpose.msra.mxu0 %v2399
        %v2401 = vand.u32 %v966, 4294901760
        %v2402 = vsub.f32 %v966, %v2401
        %v2403 = vand.u32 %v2402, 4294901760
        %2404 = vmatmul.f32.gmra.mxu0 %v2403
        %v2405 = vpop.f32.mrf.mxu0
        %v2406 = vadd.f32 %v2376, %v2405
        %v2407 = vand.u32 %v994, 4294901760
        %v2408 = vsub.f32 %v994, %v2407
        %v2409 = vand.u32 %v2408, 4294901760
        %2410 = vmatmul.f32.gmra.mxu0 %v2409
        %v2411 = vpop.f32.mrf.mxu0
        %v2412 = vadd.f32 %v2381, %v2411
        %2413 = vdwg.mxu0
        %2414 = vmatpush.xpose.msra.mxu0 0.0
        %2415 = vmatpush.xpose.msra.mxu0 0.0
        %2416 = vmatpush.xpose.msra.mxu0 0.0
        %2417 = vmatpush.xpose.msra.mxu0 0.0
        %2418 = vmatpush.xpose.msra.mxu0 0.0
        %2419 = vmatpush.xpose.msra.mxu0 0.0
        %2420 = vmatpush.xpose.msra.mxu0 0.0
        %2421 = vmatpush.xpose.msra.mxu0 0.0
        %2422 = vmatpush.xpose.msra.mxu0 0.0
        %2423 = vmatpush.xpose.msra.mxu0 0.0
        %2424 = vmatpush.xpose.msra.mxu0 0.0
        %2425 = vmatpush.xpose.msra.mxu0 0.0
        %2426 = vmatpush.xpose.msra.mxu0 0.0
        %2427 = vmatpush.xpose.msra.mxu0 0.0
        %v2428 = vand.u32 %v2087, 4294901760
        %v2429 = vsub.f32 %v2087, %v2428
        %v2430 = vand.u32 %v2429, 4294901760
        %2431 = vmatpush.xpose.msra.mxu0 %v2430
        %v2432 = vand.u32 %v2085, 4294901760
        %v2433 = vsub.f32 %v2085, %v2432
        %v2434 = vand.u32 %v2433, 4294901760
        %2435 = vmatpush.xpose.msra.mxu0 %v2434
        %v2436 = vand.u32 %v966, 4294901760
        %2437 = vmatmul.f32.gmra.mxu0 %v2436
        %v2438 = vpop.f32.mrf.mxu0
        %v2439 = vadd.f32 %v2406, %v2438
        %v2440 = vand.u32 %v994, 4294901760
        %2441 = vmatmul.f32.gmra.mxu0 %v2440
        %v2442 = vpop.f32.mrf.mxu0
        %v2443 = vadd.f32 %v2412, %v2442
        %2444 = vdwg.mxu0
        %2445 = vmatpush.xpose.msra.mxu0 0.0
        %2446 = vmatpush.xpose.msra.mxu0 0.0
        %2447 = vmatpush.xpose.msra.mxu0 0.0
        %2448 = vmatpush.xpose.msra.mxu0 0.0
        %2449 = vmatpush.xpose.msra.mxu0 0.0
        %2450 = vmatpush.xpose.msra.mxu0 0.0
        %2451 = vmatpush.xpose.msra.mxu0 0.0
        %2452 = vmatpush.xpose.msra.mxu0 0.0
        %2453 = vmatpush.xpose.msra.mxu0 0.0
        %2454 = vmatpush.xpose.msra.mxu0 0.0
        %2455 = vmatpush.xpose.msra.mxu0 0.0
        %2456 = vmatpush.xpose.msra.mxu0 0.0
        %2457 = vmatpush.xpose.msra.mxu0 0.0
        %2458 = vmatpush.xpose.msra.mxu0 0.0
        %v2459 = vand.u32 %v2087, 4294901760
        %2460 = vmatpush.xpose.msra.mxu0 %v2459
        %v2461 = vand.u32 %v2085, 4294901760
        %2462 = vmatpush.xpose.msra.mxu0 %v2461
        %v2463 = vand.u32 %v966, 4294901760
        %2464 = vmatmul.f32.gmra.mxu0 %v2463
        %v2465 = vpop.f32.mrf.mxu0
        %v2466 = vadd.f32 %v2439, %v2465
        %v2467 = vand.u32 %v994, 4294901760
        %2468 = vmatmul.f32.gmra.mxu0 %v2467
        %v2469 = vpop.f32.mrf.mxu0
        %v2470 = vadd.f32 %v2443, %v2469
        %2471 = vdwg.mxu0
        %v2472 = vmul.f32 %v2060, %v180
        %v2473 = vmul.f32 %v2064, %v181
        %v2474 = vmul.f32 %v2466, %v180
        %v2475 = vmul.f32 %v2470, %v181
        %2476 = vst.msk [vmem:[%s178] sm:$0xff] %vm771, %v2472
        %2477 = vst.msk [vmem:[%s178 + $0x8] sm:$0xff] %vm771, %v2473
        %2478 = vst.msk [vmem:[%s178 + $0x10] sm:$0xff] %vm771, %v2474
        %2479 = vst.msk [vmem:[%s178 + $0x18] sm:$0xff] %vm771, %v2475
        %s2480 = sand.u32 %s75, 1
        %s2481 = scalar_lea.sflag [#allocation4], %s2480
        %s2482 = sand.u32 %s75, 1
        %s2483 = smul.addr %s2482, 32
        %s2484 = scalar_lea.vmem [#allocation7], %s2483
        // Predicated region
        $region37: #{tpu_custom_call.1} parent=27 // pred_check
          %p2485 = pneg %p85
        $region38: #{tpu_custom_call.1} parent=27 // pred_check_branch
          %2487 = sbr.rel (%p2485) target = $region40
        $region39: #{tpu_custom_call.1} parent=27 // pred_region
          %2489 = vsyncadd %s2481, 0
          %s2490 = smul.addr %s20, 4
          %s2491 = smul.addr %s2490, 8
          %s2492 = scalar_lea.hbm %s2, %s2491
          %s2493 = sshll.u32 %s2484, 4
          %s2494 = int_to_ptr.vmem [resolvable:$true] %s2493
          %s2495 = sshll.u32 %s2492, 4
          %s2496 = int_to_ptr.hbm [resolvable:$true] %s2495
          %2501 = dma.vmem_to_hbm [thread:$0]  %s2494, 512, %s2496, %s2481, 128, 128, 8
        $region40: #{tpu_custom_call.1} parent=27 // pred_fallthru
          _
      $region28: #{tpu_custom_call.1} parent=5 // pred_fallthru
        _
      %p2502 = scmp.le.s32.totalorder 2, %s15
      // Predicated region
      $region41: #{tpu_custom_call.1} parent=5 // pred_check
        %p2503 = pneg %p2502
      $region42: #{tpu_custom_call.1} parent=5 // pred_check_branch
        %2505 = sbr.rel (%p2503) target = $region44
      $region43: #{tpu_custom_call.1} parent=5 // pred_region
        %s2506 = ssub.s32 %s15, 2
        // Predicated region
        $region45: #{tpu_custom_call.1} parent=43 // pred_check
          %p2507 = pneg %p91
        $region46: #{tpu_custom_call.1} parent=43 // pred_check_branch
          %2509 = sbr.rel (%p2507) target = $region48
        $region47: #{tpu_custom_call.1} parent=43 // pred_region
          %s2510 = sand.u32 %s76, 1
          %s2511 = scalar_lea.sflag [#allocation4], %s2510
          %s2512 = sand.u32 %s76, 1
          %s2513 = smul.addr %s2512, 32
          %s2514 = scalar_lea.vmem [#allocation7], %s2513
          %2516 = dma.done %s2511, 512
        $region48: #{tpu_custom_call.1} parent=43 // pred_fallthru
          _
      $region44: #{tpu_custom_call.1} parent=5 // pred_fallthru
        _
    $region6: #{tpu_custom_call.1} parent=1 // loop_footer
      %s19 = sadd.s32 1, %s15
    $region7: #{tpu_custom_call.1} parent=1 // loop_footer_branch
      %14 = sbr.rel target = $region3
    $region8: #{tpu_custom_call.1} parent=1 // loop_exit
      _
    %2517 = vsyncpa [#allocation3], 1
    %s2518 = scalar_lea.sflag [#allocation3], 1
    %2519 = vsyncpa %s2518, 1
    %2520 = vsyncpa [#allocation6], 1
    %2521 = vsyncpa [#allocation4], 1
    %s2522 = scalar_lea.sflag [#allocation4], 1
    %2523 = vsyncpa %s2522, 1

</llo_original>
